<compile_context>
chip_gen: v7x
topology: tpu7x:2x2x1
jax: 0.10.0
libtpu: 0.0.40
codegen_flags: <defaults>
</compile_context>

<pallas_src>
import math
import functools

import jax
import jax.numpy as jnp
from jax import lax
from jax.experimental import pallas as pl
from jax.experimental.pallas import tpu as pltpu


def cross_attention_kernel(x_ref, y_ref,
                           wq_ref, bq_ref,
                           wk_ref, bk_ref,
                           wv_ref, bv_ref,
                           wo_ref, bo_ref,
                           o_ref,
                           k_scr, v_scr,
                           *, n_heads: int, d_head: int):
    """One grid step = (batch b, query tile qi).

    Refs (batch dim squeezed via pl.Squeezed()):
      x_ref : (TQ,  De)  compute dtype (bf16)
      y_ref : (Lkv, Dc)  compute dtype (bf16)
      w*    : (in, out)  compute dtype (1/sqrt(d_head) folded into Wq)
      b*    : (1, out)   float32 (added after f32 accumulation)
      o_ref : (TQ,  De)  output dtype
      k_scr/v_scr : (Lkv, De) compute dtype VMEM scratch (K/V cache per batch)
    """
    cdt = x_ref.dtype

    # K/V projections once per batch element; reused across all query tiles.
    @pl.when(pl.program_id(1) == 0)
    def _():
        y = y_ref[...]
        k = jnp.dot(y, wk_ref[...], preferred_element_type=jnp.float32) + bk_ref[...]
        v = jnp.dot(y, wv_ref[...], preferred_element_type=jnp.float32) + bv_ref[...]
        k_scr[...] = k.astype(cdt)
        v_scr[...] = v.astype(cdt)

    x = x_ref[...]
    # bf16 MXU operands, f32 accumulation, f32 bias add (scale pre-folded).
    q = (jnp.dot(x, wq_ref[...], preferred_element_type=jnp.float32)
         + bq_ref[...]).astype(cdt)
    k = k_scr[...]
    v = v_scr[...]

    # Per-head attention on static lane slices of the (L, H*Dh) layout.
    # Each head's output is folded straight into the output projection,
    # so there is no head-output concatenate and live ranges stay bounded.
    acc = jnp.zeros(o_ref.shape, jnp.float32)          # (TQ, De)
    for h in range(n_heads):
        sl = slice(h * d_head, (h + 1) * d_head)
        qh = q[:, sl]                                   # (TQ,  Dh)
        kh = k[:, sl]                                   # (Lkv, Dh)
        vh = v[:, sl]                                   # (Lkv, Dh)

        # scores = qh @ kh.T without an explicit transpose (MXU trans_b path).
        s = lax.dot_general(qh, kh, (((1,), (1,)), ((), ())),
                            preferred_element_type=jnp.float32)   # (TQ, Lkv)

        m = jnp.max(s, axis=-1, keepdims=True)
        p = jnp.exp(s - m)
        denom = jnp.sum(p, axis=-1, keepdims=True)
        # EUP approximate reciprocal: normalization nearly free vs. VALU div.
        p = p * pl.reciprocal(denom, approx=True)

        ho = jnp.dot(p.astype(cdt), vh, preferred_element_type=jnp.float32)
        acc = acc + jnp.dot(ho.astype(cdt), wo_ref[sl, :],
                            preferred_element_type=jnp.float32)

    o_ref[...] = (acc + bo_ref[...]).astype(o_ref.dtype)


def _round_up(x: int, m: int) -> int:
    return (x + m - 1) // m * m


def _vmem_capacity_bytes() -> int:
    try:
        return int(pltpu.get_tpu_info().vmem_capacity_bytes)
    except Exception:
        return 64 * 1024 * 1024   # conservative: v7x per-TC capacity


def cross_attention(x, y, params, n_heads: int, compute_dtype=jnp.bfloat16):
    """x: (B, Lq, d_embed), y: (B, Lkv, d_cross) -> (B, Lq, d_embed)."""
    B, Lq, De = x.shape
    _, Lkv, Dc = y.shape
    assert De % n_heads == 0
    d_head = De // n_heads

    wq, bq, wk, bk, wv, bv, wo, bo = params

    # Fold 1/sqrt(d_head) into the Q projection on the host (zero kernel cost).
    scale = 1.0 / math.sqrt(d_head)
    wq = wq * scale
    bq = bq * scale

    xc = x.astype(compute_dtype)
    yc = y.astype(compute_dtype)
    wq, wk, wv, wo = (w.astype(compute_dtype) for w in (wq, wk, wv, wo))
    bq, bk, bv, bo = (b.astype(jnp.float32) for b in (bq, bk, bv, bo))

    # Generation-aware tile / VMEM choices.
    vmem_cap = _vmem_capacity_bytes()
    tq_cap = 512 if vmem_cap > 96 * 1024 * 1024 else 256

    TQ = min(tq_cap, _round_up(Lq, 8))
    Lq_pad = _round_up(Lq, TQ)
    if Lq_pad != Lq:
        xc = jnp.pad(xc, ((0, 0), (0, Lq_pad - Lq), (0, 0)))
    nq = Lq_pad // TQ

    it = jnp.dtype(compute_dtype).itemsize
    oit = jnp.dtype(x.dtype).itemsize
    est_bytes = (
        2 * TQ * De * it                         # x tile (double-buffered)
        + 2 * Lkv * Dc * it                      # y tile (double-buffered)
        + 2 * TQ * De * oit                      # out tile (double-buffered)
        + (2 * De * De + 2 * Dc * De) * it       # weights (single-buffered)
        + 4 * De * 4                             # biases (f32)
        + 2 * Lkv * De * it                      # K/V scratch
        + (2 * TQ * De + TQ * Lkv + 2 * Lkv * De) * 4)   # f32 intermediates
    headroom = 12 * 1024 * 1024
    vmem_limit = int(max(16 * 1024 * 1024,
                         min(vmem_cap - headroom,
                             max(32 * 1024 * 1024, 2 * est_bytes))))

    # Cost estimate reflecting K/V projection once per batch element.
    flops = 2 * B * (Lq_pad * De * De            # Q projection
                     + 2 * Lkv * Dc * De         # K, V projections (once / b)
                     + 2 * Lq_pad * Lkv * De     # QK^T + PV (all heads)
                     + Lq_pad * De * De)         # output projection
    transcendentals = B * n_heads * Lq_pad * (Lkv + 1)
    bytes_accessed = (
        (xc.size + yc.size) * it
        + (wq.size + wk.size + wv.size + wo.size) * it
        + (bq.size + bk.size + bv.size + bo.size) * 4
        + B * Lq_pad * De * oit)

    kernel = functools.partial(cross_attention_kernel,
                               n_heads=n_heads, d_head=d_head)

    def build(single_buffer_weights: bool):
        def resident(shape):
            # Constant index_map => block stays resident across the grid.
            if single_buffer_weights:
                return pl.BlockSpec(shape, lambda b, qi: (0,) * len(shape),
                                    pipeline_mode=pl.Buffered(1))
            return pl.BlockSpec(shape, lambda b, qi: (0,) * len(shape))

        in_specs = [
            pl.BlockSpec((pl.Squeezed(), TQ, De), lambda b, qi: (b, qi, 0)),   # x
            pl.BlockSpec((pl.Squeezed(), Lkv, Dc), lambda b, qi: (b, 0, 0)),   # y
            resident((De, De)), resident((1, De)),                             # Wq, bq
            resident((Dc, De)), resident((1, De)),                             # Wk, bk
            resident((Dc, De)), resident((1, De)),                             # Wv, bv
            resident((De, De)), resident((1, De)),                             # Wo, bo
        ]
        out_specs = pl.BlockSpec((pl.Squeezed(), TQ, De), lambda b, qi: (b, qi, 0))

        return pl.pallas_call(
            kernel,
            out_shape=jax.ShapeDtypeStruct((B, Lq_pad, De), x.dtype),
            grid_spec=pltpu.PrefetchScalarGridSpec(
                num_scalar_prefetch=0,
                grid=(B, nq),
                in_specs=in_specs,
                out_specs=out_specs,
                scratch_shapes=[pltpu.VMEM((Lkv, De), compute_dtype),   # K cache
                                pltpu.VMEM((Lkv, De), compute_dtype)],  # V cache
            ),
            compiler_params=pltpu.CompilerParams(
                dimension_semantics=("parallel", "arbitrary"),
                vmem_limit_bytes=vmem_limit),
            cost_estimate=pl.CostEstimate(flops=flops,
                                          transcendentals=transcendentals,
                                          bytes_accessed=bytes_accessed),
        )

    args = (xc, yc, wq, bq, wk, bk, wv, bv, wo, bo)
    try:
        out = build(True)(*args)
    except Exception:
        # Fall back to default double-buffered weight specs if Buffered(1)
        # is rejected by the installed Pallas version.
        out = build(False)(*args)

    if Lq_pad != Lq:
        out = out[:, :Lq, :]
    return out


def reference(x, y, params, n_heads: int):
    """Pure-JAX f32 reference matching the PyTorch module."""
    wq, bq, wk, bk, wv, bv, wo, bo = params
    B, Lq, De = x.shape
    d_head = De // n_heads
    q = x @ wq + bq[0]
    k = y @ wk + bk[0]
    v = y @ wv + bv[0]
    q = q.reshape(B, Lq, n_heads, d_head).transpose(0, 2, 1, 3)
    k = k.reshape(B, -1, n_heads, d_head).transpose(0, 2, 1, 3)
    v = v.reshape(B, -1, n_heads, d_head).transpose(0, 2, 1, 3)
    w = jnp.einsum('bhqd,bhkd->bhqk', q, k) / math.sqrt(d_head)
    w = jax.nn.softmax(w, axis=-1)
    o = jnp.einsum('bhqk,bhkd->bhqd', w, v)
    o = o.transpose(0, 2, 1, 3).reshape(B, Lq, De)
    return o @ wo + bo[0]


if __name__ == "__main__":
    B, Lq, Lkv = 2, 8, 10
    n_heads, d_embed, d_cross = 2, 32, 16

    key = jax.random.PRNGKey(0)
    keys = jax.random.split(key, 12)

    x = jax.random.normal(keys[0], (B, Lq, d_embed), dtype=jnp.float32)
    y = jax.random.normal(keys[1], (B, Lkv, d_cross), dtype=jnp.float32)

    def linear_init(kw, kb, fan_in, fan_out):
        # PyTorch-style uniform init bounds, deterministic via fixed keys.
        bound = 1.0 / math.sqrt(fan_in)
        w = jax.random.uniform(kw, (fan_in, fan_out), jnp.float32, -bound, bound)
        b = jax.random.uniform(kb, (1, fan_out), jnp.float32, -bound, bound)
        return w, b

    wq, bq = linear_init(keys[2], keys[3], d_embed, d_embed)
    wk, bk = linear_init(keys[4], keys[5], d_cross, d_embed)
    wv, bv = linear_init(keys[6], keys[7], d_cross, d_embed)
    wo, bo = linear_init(keys[8], keys[9], d_embed, d_embed)
    params = (wq, bq, wk, bk, wv, bv, wo, bo)

    out = cross_attention(x, y, params, n_heads)
    out = jax.block_until_ready(out)

    ref = reference(x, y, params, n_heads)
    assert out.shape == (B, Lq, d_embed)
    # bf16 MXU operands + EUP approx reciprocal -> looser tolerance than f32.
    err = jnp.max(jnp.abs(out - ref))
    assert jnp.allclose(out, ref, atol=5e-2, rtol=5e-2), f"max err {err}"
    print("KERNEL_OK")
</pallas_src>

<mosaic_0001>
module attributes {stable_mosaic.version = 11 : i64} {
  func.func @cross_attention_kernel(%arg0: i32, %arg1: i32, %arg2: memref<1x8x32xbf16, #tpu.memory_space<vmem>>, %arg3: memref<1x10x16xbf16, #tpu.memory_space<vmem>>, %arg4: memref<32x32xbf16, #tpu.memory_space<vmem>>, %arg5: memref<1x32xf32, #tpu.memory_space<vmem>>, %arg6: memref<16x32xbf16, #tpu.memory_space<vmem>>, %arg7: memref<1x32xf32, #tpu.memory_space<vmem>>, %arg8: memref<16x32xbf16, #tpu.memory_space<vmem>>, %arg9: memref<1x32xf32, #tpu.memory_space<vmem>>, %arg10: memref<32x32xbf16, #tpu.memory_space<vmem>>, %arg11: memref<1x32xf32, #tpu.memory_space<vmem>>, %arg12: memref<1x8x32xf32, #tpu.memory_space<vmem>>, %arg13: memref<10x32xbf16, #tpu.memory_space<vmem>>, %arg14: memref<10x32xbf16, #tpu.memory_space<vmem>>) attributes {dimension_semantics = [#tpu.dimension_semantics<parallel>, #tpu.dimension_semantics<arbitrary>], iteration_bounds = array<i64: 2, 1>, scalar_prefetch = 0 : i64, scratch_operands = 2 : i64, tpu.core_type = #tpu.core_type<tc>, window_params = [{transform_indices = @transform_0, window_bounds = array<i64: 1, 8, 32>}, {transform_indices = @transform_1, window_bounds = array<i64: 1, 10, 16>}, {pipeline_mode = #tpu.pipeline_mode<synchronous>, transform_indices = @transform_2, window_bounds = array<i64: 32, 32>}, {pipeline_mode = #tpu.pipeline_mode<synchronous>, transform_indices = @transform_3, window_bounds = array<i64: 1, 32>}, {pipeline_mode = #tpu.pipeline_mode<synchronous>, transform_indices = @transform_4, window_bounds = array<i64: 16, 32>}, {pipeline_mode = #tpu.pipeline_mode<synchronous>, transform_indices = @transform_5, window_bounds = array<i64: 1, 32>}, {pipeline_mode = #tpu.pipeline_mode<synchronous>, transform_indices = @transform_6, window_bounds = array<i64: 16, 32>}, {pipeline_mode = #tpu.pipeline_mode<synchronous>, transform_indices = @transform_7, window_bounds = array<i64: 1, 32>}, {pipeline_mode = #tpu.pipeline_mode<synchronous>, transform_indices = @transform_8, window_bounds = array<i64: 32, 32>}, {pipeline_mode = #tpu.pipeline_mode<synchronous>, transform_indices = @transform_9, window_bounds = array<i64: 1, 32>}, {transform_indices = @transform_10, window_bounds = array<i64: 1, 8, 32>}]} {
    %c0_i32 = arith.constant 0 : i32
    %0 = arith.cmpi eq, %arg1, %c0_i32 : i32
    %1 = arith.extui %0 : i1 to i32
    %c0_i32_0 = arith.constant 0 : i32
    %2 = arith.cmpi ne, %1, %c0_i32_0 : i32
    scf.if %2 {
      %c0_30 = arith.constant 0 : index
      %c0_31 = arith.constant 0 : index
      %c0_32 = arith.constant 0 : index
      %60 = vector.load %arg3[%c0_30, %c0_31, %c0_32] : memref<1x10x16xbf16, #tpu.memory_space<vmem>>, vector<1x10x16xbf16>
      %61 = vector.shape_cast %60 : vector<1x10x16xbf16> to vector<10x16xbf16>
      %c0_33 = arith.constant 0 : index
      %c0_34 = arith.constant 0 : index
      %62 = vector.load %arg6[%c0_33, %c0_34] : memref<16x32xbf16, #tpu.memory_space<vmem>>, vector<16x32xbf16>
      %cst_35 = arith.constant dense<0.000000e+00> : vector<10x32xf32>
      %63 = tpu.matmul %61, %62, %cst_35 {dimension_numbers = #tpu.dot_dimension_numbers<[1], [0], [0], [1], [0, 0, 1, 1], [], []>} : vector<10x16xbf16>, vector<16x32xbf16>, vector<10x32xf32> -> vector<10x32xf32>
      %c0_36 = arith.constant 0 : index
      %c0_37 = arith.constant 0 : index
      %64 = vector.load %arg7[%c0_36, %c0_37] : memref<1x32xf32, #tpu.memory_space<vmem>>, vector<1x32xf32>
      %65 = vector.broadcast %64 : vector<1x32xf32> to vector<10x32xf32>
      %66 = arith.addf %63, %65 : vector<10x32xf32>
      %c0_38 = arith.constant 0 : index
      %c0_39 = arith.constant 0 : index
      %67 = vector.load %arg8[%c0_38, %c0_39] : memref<16x32xbf16, #tpu.memory_space<vmem>>, vector<16x32xbf16>
      %cst_40 = arith.constant dense<0.000000e+00> : vector<10x32xf32>
      %68 = tpu.matmul %61, %67, %cst_40 {dimension_numbers = #tpu.dot_dimension_numbers<[1], [0], [0], [1], [0, 0, 1, 1], [], []>} : vector<10x16xbf16>, vector<16x32xbf16>, vector<10x32xf32> -> vector<10x32xf32>
      %c0_41 = arith.constant 0 : index
      %c0_42 = arith.constant 0 : index
      %69 = vector.load %arg9[%c0_41, %c0_42] : memref<1x32xf32, #tpu.memory_space<vmem>>, vector<1x32xf32>
      %70 = vector.broadcast %69 : vector<1x32xf32> to vector<10x32xf32>
      %71 = arith.addf %68, %70 : vector<10x32xf32>
      %72 = arith.truncf %66 : vector<10x32xf32> to vector<10x32xbf16>
      %c0_43 = arith.constant 0 : index
      %c0_44 = arith.constant 0 : index
      %73 = vector.load %arg13[%c0_43, %c0_44] : memref<10x32xbf16, #tpu.memory_space<vmem>>, vector<10x32xbf16>
      tpu.vector_store %arg13[%c0_43, %c0_44], %72 {strides = array<i32>} : memref<10x32xbf16, #tpu.memory_space<vmem>>, vector<10x32xbf16>,
      %74 = arith.truncf %71 : vector<10x32xf32> to vector<10x32xbf16>
      %c0_45 = arith.constant 0 : index
      %c0_46 = arith.constant 0 : index
      %75 = vector.load %arg14[%c0_45, %c0_46] : memref<10x32xbf16, #tpu.memory_space<vmem>>, vector<10x32xbf16>
      tpu.vector_store %arg14[%c0_45, %c0_46], %74 {strides = array<i32>} : memref<10x32xbf16, #tpu.memory_space<vmem>>, vector<10x32xbf16>,
    } else {
    }
    %c0 = arith.constant 0 : index
    %c0_1 = arith.constant 0 : index
    %c0_2 = arith.constant 0 : index
    %3 = vector.load %arg2[%c0, %c0_1, %c0_2] : memref<1x8x32xbf16, #tpu.memory_space<vmem>>, vector<1x8x32xbf16>
    %4 = vector.shape_cast %3 : vector<1x8x32xbf16> to vector<8x32xbf16>
    %c0_3 = arith.constant 0 : index
    %c0_4 = arith.constant 0 : index
    %5 = vector.load %arg4[%c0_3, %c0_4] : memref<32x32xbf16, #tpu.memory_space<vmem>>, vector<32x32xbf16>
    %cst = arith.constant dense<0.000000e+00> : vector<8x32xf32>
    %6 = tpu.matmul %4, %5, %cst {dimension_numbers = #tpu.dot_dimension_numbers<[1], [0], [0], [1], [0, 0, 1, 1], [], []>} : vector<8x32xbf16>, vector<32x32xbf16>, vector<8x32xf32> -> vector<8x32xf32>
    %c0_5 = arith.constant 0 : index
    %c0_6 = arith.constant 0 : index
    %7 = vector.load %arg5[%c0_5, %c0_6] : memref<1x32xf32, #tpu.memory_space<vmem>>, vector<1x32xf32>
    %8 = vector.broadcast %7 : vector<1x32xf32> to vector<8x32xf32>
    %9 = arith.addf %6, %8 : vector<8x32xf32>
    %10 = arith.truncf %9 : vector<8x32xf32> to vector<8x32xbf16>
    %c0_7 = arith.constant 0 : index
    %c0_8 = arith.constant 0 : index
    %11 = vector.load %arg13[%c0_7, %c0_8] : memref<10x32xbf16, #tpu.memory_space<vmem>>, vector<10x32xbf16>
    %c0_9 = arith.constant 0 : index
    %c0_10 = arith.constant 0 : index
    %12 = vector.load %arg14[%c0_9, %c0_10] : memref<10x32xbf16, #tpu.memory_space<vmem>>, vector<10x32xbf16>
    %cst_11 = arith.constant 0.000000e+00 : f32
    %13 = vector.broadcast %cst_11 : f32 to vector<8x32xf32>
    %14 = vector.extract_strided_slice %10 {offsets = [0, 0], sizes = [8, 16], strides = [1, 1]} : vector<8x32xbf16> to vector<8x16xbf16>
    %15 = vector.extract_strided_slice %11 {offsets = [0, 0], sizes = [10, 16], strides = [1, 1]} : vector<10x32xbf16> to vector<10x16xbf16>
    %16 = vector.extract_strided_slice %12 {offsets = [0, 0], sizes = [10, 16], strides = [1, 1]} : vector<10x32xbf16> to vector<10x16xbf16>
    %cst_12 = arith.constant dense<0.000000e+00> : vector<8x10xf32>
    %17 = tpu.matmul %14, %15, %cst_12 {dimension_numbers = #tpu.dot_dimension_numbers<[1], [1], [0], [0], [0, 0, 1, 0], [], []>} : vector<8x16xbf16>, vector<10x16xbf16>, vector<8x10xf32> -> vector<8x10xf32>
    %cst_13 = arith.constant dense<0xFF800000> : vector<8xf32>
    %18 = vector.multi_reduction <maximumf>, %17, %cst_13 [1] : vector<8x10xf32> to vector<8xf32>
    %19 = vector.shape_cast %18 : vector<8xf32> to vector<8x1xf32>
    %20 = vector.broadcast %19 : vector<8x1xf32> to vector<8x10xf32>
    %21 = arith.subf %17, %20 : vector<8x10xf32>
    %22 = math.exp %21 : vector<8x10xf32>
    %cst_14 = arith.constant dense<0.000000e+00> : vector<8xf32>
    %23 = vector.multi_reduction <add>, %22, %cst_14 [1] : vector<8x10xf32> to vector<8xf32>
    %24 = vector.shape_cast %23 : vector<8xf32> to vector<8x1xf32>
    %25 = tpu.reciprocal %24 {approx = true} : vector<8x1xf32> -> vector<8x1xf32>
    %26 = vector.broadcast %25 : vector<8x1xf32> to vector<8x10xf32>
    %27 = arith.mulf %22, %26 : vector<8x10xf32>
    %28 = arith.truncf %27 : vector<8x10xf32> to vector<8x10xbf16>
    %cst_15 = arith.constant dense<0.000000e+00> : vector<8x16xf32>
    %29 = tpu.matmul %28, %16, %cst_15 {dimension_numbers = #tpu.dot_dimension_numbers<[1], [0], [0], [1], [0, 0, 1, 1], [], []>} : vector<8x10xbf16>, vector<10x16xbf16>, vector<8x16xf32> -> vector<8x16xf32>
    %30 = arith.truncf %29 : vector<8x16xf32> to vector<8x16xbf16>
    %c0_16 = arith.constant 0 : index
    %c0_17 = arith.constant 0 : index
    %31 = vector.load %arg10[%c0_16, %c0_17] : memref<32x32xbf16, #tpu.memory_space<vmem>>, vector<16x32xbf16>
    %cst_18 = arith.constant dense<0.000000e+00> : vector<8x32xf32>
    %32 = tpu.matmul %30, %31, %cst_18 {dimension_numbers = #tpu.dot_dimension_numbers<[1], [0], [0], [1], [0, 0, 1, 1], [], []>} : vector<8x16xbf16>, vector<16x32xbf16>, vector<8x32xf32> -> vector<8x32xf32>
    %33 = arith.addf %13, %32 : vector<8x32xf32>
    %34 = vector.extract_strided_slice %10 {offsets = [0, 16], sizes = [8, 16], strides = [1, 1]} : vector<8x32xbf16> to vector<8x16xbf16>
    %35 = vector.extract_strided_slice %11 {offsets = [0, 16], sizes = [10, 16], strides = [1, 1]} : vector<10x32xbf16> to vector<10x16xbf16>
    %36 = vector.extract_strided_slice %12 {offsets = [0, 16], sizes = [10, 16], strides = [1, 1]} : vector<10x32xbf16> to vector<10x16xbf16>
    %cst_19 = arith.constant dense<0.000000e+00> : vector<8x10xf32>
    %37 = tpu.matmul %34, %35, %cst_19 {dimension_numbers = #tpu.dot_dimension_numbers<[1], [1], [0], [0], [0, 0, 1, 0], [], []>} : vector<8x16xbf16>, vector<10x16xbf16>, vector<8x10xf32> -> vector<8x10xf32>
    %cst_20 = arith.constant dense<0xFF800000> : vector<8xf32>
    %38 = vector.multi_reduction <maximumf>, %37, %cst_20 [1] : vector<8x10xf32> to vector<8xf32>
    %39 = vector.shape_cast %38 : vector<8xf32> to vector<8x1xf32>
    %40 = vector.broadcast %39 : vector<8x1xf32> to vector<8x10xf32>
    %41 = arith.subf %37, %40 : vector<8x10xf32>
    %42 = math.exp %41 : vector<8x10xf32>
    %cst_21 = arith.constant dense<0.000000e+00> : vector<8xf32>
    %43 = vector.multi_reduction <add>, %42, %cst_21 [1] : vector<8x10xf32> to vector<8xf32>
    %44 = vector.shape_cast %43 : vector<8xf32> to vector<8x1xf32>
    %45 = tpu.reciprocal %44 {approx = true} : vector<8x1xf32> -> vector<8x1xf32>
    %46 = vector.broadcast %45 : vector<8x1xf32> to vector<8x10xf32>
    %47 = arith.mulf %42, %46 : vector<8x10xf32>
    %48 = arith.truncf %47 : vector<8x10xf32> to vector<8x10xbf16>
    %cst_22 = arith.constant dense<0.000000e+00> : vector<8x16xf32>
    %49 = tpu.matmul %48, %36, %cst_22 {dimension_numbers = #tpu.dot_dimension_numbers<[1], [0], [0], [1], [0, 0, 1, 1], [], []>} : vector<8x10xbf16>, vector<10x16xbf16>, vector<8x16xf32> -> vector<8x16xf32>
    %50 = arith.truncf %49 : vector<8x16xf32> to vector<8x16xbf16>
    %c16 = arith.constant 16 : index
    %c0_23 = arith.constant 0 : index
    %51 = vector.load %arg10[%c16, %c0_23] : memref<32x32xbf16, #tpu.memory_space<vmem>>, vector<16x32xbf16>
    %cst_24 = arith.constant dense<0.000000e+00> : vector<8x32xf32>
    %52 = tpu.matmul %50, %51, %cst_24 {dimension_numbers = #tpu.dot_dimension_numbers<[1], [0], [0], [1], [0, 0, 1, 1], [], []>} : vector<8x16xbf16>, vector<16x32xbf16>, vector<8x32xf32> -> vector<8x32xf32>
    %53 = arith.addf %33, %52 : vector<8x32xf32>
    %c0_25 = arith.constant 0 : index
    %c0_26 = arith.constant 0 : index
    %54 = vector.load %arg11[%c0_25, %c0_26] : memref<1x32xf32, #tpu.memory_space<vmem>>, vector<1x32xf32>
    %55 = vector.broadcast %54 : vector<1x32xf32> to vector<8x32xf32>
    %56 = arith.addf %53, %55 : vector<8x32xf32>
    %c0_27 = arith.constant 0 : index
    %c0_28 = arith.constant 0 : index
    %c0_29 = arith.constant 0 : index
    %57 = vector.load %arg12[%c0_27, %c0_28, %c0_29] : memref<1x8x32xf32, #tpu.memory_space<vmem>>, vector<1x8x32xf32>
    %58 = vector.shape_cast %57 : vector<1x8x32xf32> to vector<8x32xf32>
    %59 = vector.shape_cast %56 : vector<8x32xf32> to vector<1x8x32xf32>
    tpu.vector_store %arg12[%c0_27, %c0_28, %c0_29], %59 {strides = array<i32>} : memref<1x8x32xf32, #tpu.memory_space<vmem>>, vector<1x8x32xf32>,
    return
  }
  func.func @transform_0(%arg0: i32, %arg1: i32) -> (i32, i32, i32) {
    %c0_i32 = arith.constant 0 : i32
    %c0_i32_0 = arith.constant 0 : i32
    return %arg0, %arg1, %c0_i32 : i32, i32, i32
  }
  func.func @transform_1(%arg0: i32, %arg1: i32) -> (i32, i32, i32) {
    %c0_i32 = arith.constant 0 : i32
    %c0_i32_0 = arith.constant 0 : i32
    %c0_i32_1 = arith.constant 0 : i32
    return %arg0, %c0_i32, %c0_i32_0 : i32, i32, i32
  }
  func.func @transform_2(%arg0: i32, %arg1: i32) -> (i32, i32) {
    %c0_i32 = arith.constant 0 : i32
    %c0_i32_0 = arith.constant 0 : i32
    %c0_i32_1 = arith.constant 0 : i32
    return %c0_i32, %c0_i32_0 : i32, i32
  }
  func.func @transform_3(%arg0: i32, %arg1: i32) -> (i32, i32) {
    %c0_i32 = arith.constant 0 : i32
    %c0_i32_0 = arith.constant 0 : i32
    %c0_i32_1 = arith.constant 0 : i32
    return %c0_i32, %c0_i32_0 : i32, i32
  }
  func.func @transform_4(%arg0: i32, %arg1: i32) -> (i32, i32) {
    %c0_i32 = arith.constant 0 : i32
    %c0_i32_0 = arith.constant 0 : i32
    %c0_i32_1 = arith.constant 0 : i32
    return %c0_i32, %c0_i32_0 : i32, i32
  }
  func.func @transform_5(%arg0: i32, %arg1: i32) -> (i32, i32) {
    %c0_i32 = arith.constant 0 : i32
    %c0_i32_0 = arith.constant 0 : i32
    %c0_i32_1 = arith.constant 0 : i32
    return %c0_i32, %c0_i32_0 : i32, i32
  }
  func.func @transform_6(%arg0: i32, %arg1: i32) -> (i32, i32) {
    %c0_i32 = arith.constant 0 : i32
    %c0_i32_0 = arith.constant 0 : i32
    %c0_i32_1 = arith.constant 0 : i32
    return %c0_i32, %c0_i32_0 : i32, i32
  }
  func.func @transform_7(%arg0: i32, %arg1: i32) -> (i32, i32) {
    %c0_i32 = arith.constant 0 : i32
    %c0_i32_0 = arith.constant 0 : i32
    %c0_i32_1 = arith.constant 0 : i32
    return %c0_i32, %c0_i32_0 : i32, i32
  }
  func.func @transform_8(%arg0: i32, %arg1: i32) -> (i32, i32) {
    %c0_i32 = arith.constant 0 : i32
    %c0_i32_0 = arith.constant 0 : i32
    %c0_i32_1 = arith.constant 0 : i32
    return %c0_i32, %c0_i32_0 : i32, i32
  }
  func.func @transform_9(%arg0: i32, %arg1: i32) -> (i32, i32) {
    %c0_i32 = arith.constant 0 : i32
    %c0_i32_0 = arith.constant 0 : i32
    %c0_i32_1 = arith.constant 0 : i32
    return %c0_i32, %c0_i32_0 : i32, i32
  }
  func.func @transform_10(%arg0: i32, %arg1: i32) -> (i32, i32, i32) {
    %c0_i32 = arith.constant 0 : i32
    %c0_i32_0 = arith.constant 0 : i32
    return %arg0, %arg1, %c0_i32 : i32, i32, i32
  }
}

module attributes {stable_mosaic.version = 11 : i64} {
  func.func @cross_attention_kernel(%arg0: i32, %arg1: i32, %arg2: memref<1x8x32xbf16, #tpu.memory_space<vmem>>, %arg3: memref<1x10x16xbf16, #tpu.memory_space<vmem>>, %arg4: memref<32x32xbf16, #tpu.memory_space<vmem>>, %arg5: memref<1x32xf32, #tpu.memory_space<vmem>>, %arg6: memref<16x32xbf16, #tpu.memory_space<vmem>>, %arg7: memref<1x32xf32, #tpu.memory_space<vmem>>, %arg8: memref<16x32xbf16, #tpu.memory_space<vmem>>, %arg9: memref<1x32xf32, #tpu.memory_space<vmem>>, %arg10: memref<32x32xbf16, #tpu.memory_space<vmem>>, %arg11: memref<1x32xf32, #tpu.memory_space<vmem>>, %arg12: memref<1x8x32xf32, #tpu.memory_space<vmem>>, %arg13: memref<10x32xbf16, #tpu.memory_space<vmem>>, %arg14: memref<10x32xbf16, #tpu.memory_space<vmem>>) attributes {dimension_semantics = [#tpu.dimension_semantics<parallel>, #tpu.dimension_semantics<arbitrary>], iteration_bounds = array<i64: 2, 1>, scalar_prefetch = 0 : i64, scratch_operands = 2 : i64, tpu.core_type = #tpu.core_type<tc>, window_params = [{transform_indices = @transform_0, window_bounds = array<i64: 1, 8, 32>}, {transform_indices = @transform_1, window_bounds = array<i64: 1, 10, 16>}, {pipeline_mode = #tpu.pipeline_mode<synchronous>, transform_indices = @transform_2, window_bounds = array<i64: 32, 32>}, {pipeline_mode = #tpu.pipeline_mode<synchronous>, transform_indices = @transform_3, window_bounds = array<i64: 1, 32>}, {pipeline_mode = #tpu.pipeline_mode<synchronous>, transform_indices = @transform_4, window_bounds = array<i64: 16, 32>}, {pipeline_mode = #tpu.pipeline_mode<synchronous>, transform_indices = @transform_5, window_bounds = array<i64: 1, 32>}, {pipeline_mode = #tpu.pipeline_mode<synchronous>, transform_indices = @transform_6, window_bounds = array<i64: 16, 32>}, {pipeline_mode = #tpu.pipeline_mode<synchronous>, transform_indices = @transform_7, window_bounds = array<i64: 1, 32>}, {pipeline_mode = #tpu.pipeline_mode<synchronous>, transform_indices = @transform_8, window_bounds = array<i64: 32, 32>}, {pipeline_mode = #tpu.pipeline_mode<synchronous>, transform_indices = @transform_9, window_bounds = array<i64: 1, 32>}, {transform_indices = @transform_10, window_bounds = array<i64: 1, 8, 32>}]} {
    %c0_i32 = arith.constant 0 : i32
    %0 = arith.cmpi eq, %arg1, %c0_i32 : i32
    %1 = arith.extui %0 : i1 to i32
    %c0_i32_0 = arith.constant 0 : i32
    %2 = arith.cmpi ne, %1, %c0_i32_0 : i32
    scf.if %2 {
      %c0_30 = arith.constant 0 : index
      %c0_31 = arith.constant 0 : index
      %c0_32 = arith.constant 0 : index
      %60 = vector.load %arg3[%c0_30, %c0_31, %c0_32] : memref<1x10x16xbf16, #tpu.memory_space<vmem>>, vector<1x10x16xbf16>
      %61 = vector.shape_cast %60 : vector<1x10x16xbf16> to vector<10x16xbf16>
      %c0_33 = arith.constant 0 : index
      %c0_34 = arith.constant 0 : index
      %62 = vector.load %arg6[%c0_33, %c0_34] : memref<16x32xbf16, #tpu.memory_space<vmem>>, vector<16x32xbf16>
      %cst_35 = arith.constant dense<0.000000e+00> : vector<10x32xf32>
      %63 = tpu.matmul %61, %62, %cst_35 {dimension_numbers = #tpu.dot_dimension_numbers<[1], [0], [0], [1], [0, 0, 1, 1], [], []>} : vector<10x16xbf16>, vector<16x32xbf16>, vector<10x32xf32> -> vector<10x32xf32>
      %c0_36 = arith.constant 0 : index
      %c0_37 = arith.constant 0 : index
      %64 = vector.load %arg7[%c0_36, %c0_37] : memref<1x32xf32, #tpu.memory_space<vmem>>, vector<1x32xf32>
      %65 = vector.broadcast %64 : vector<1x32xf32> to vector<10x32xf32>
      %66 = arith.addf %63, %65 : vector<10x32xf32>
      %c0_38 = arith.constant 0 : index
      %c0_39 = arith.constant 0 : index
      %67 = vector.load %arg8[%c0_38, %c0_39] : memref<16x32xbf16, #tpu.memory_space<vmem>>, vector<16x32xbf16>
      %cst_40 = arith.constant dense<0.000000e+00> : vector<10x32xf32>
      %68 = tpu.matmul %61, %67, %cst_40 {dimension_numbers = #tpu.dot_dimension_numbers<[1], [0], [0], [1], [0, 0, 1, 1], [], []>} : vector<10x16xbf16>, vector<16x32xbf16>, vector<10x32xf32> -> vector<10x32xf32>
      %c0_41 = arith.constant 0 : index
      %c0_42 = arith.constant 0 : index
      %69 = vector.load %arg9[%c0_41, %c0_42] : memref<1x32xf32, #tpu.memory_space<vmem>>, vector<1x32xf32>
      %70 = vector.broadcast %69 : vector<1x32xf32> to vector<10x32xf32>
      %71 = arith.addf %68, %70 : vector<10x32xf32>
      %72 = arith.truncf %66 : vector<10x32xf32> to vector<10x32xbf16>
      %c0_43 = arith.constant 0 : index
      %c0_44 = arith.constant 0 : index
      %73 = vector.load %arg13[%c0_43, %c0_44] : memref<10x32xbf16, #tpu.memory_space<vmem>>, vector<10x32xbf16>
      tpu.vector_store %arg13[%c0_43, %c0_44], %72 {strides = array<i32>} : memref<10x32xbf16, #tpu.memory_space<vmem>>, vector<10x32xbf16>,
      %74 = arith.truncf %71 : vector<10x32xf32> to vector<10x32xbf16>
      %c0_45 = arith.constant 0 : index
      %c0_46 = arith.constant 0 : index
      %75 = vector.load %arg14[%c0_45, %c0_46] : memref<10x32xbf16, #tpu.memory_space<vmem>>, vector<10x32xbf16>
      tpu.vector_store %arg14[%c0_45, %c0_46], %74 {strides = array<i32>} : memref<10x32xbf16, #tpu.memory_space<vmem>>, vector<10x32xbf16>,
    } else {
    }
    %c0 = arith.constant 0 : index
    %c0_1 = arith.constant 0 : index
    %c0_2 = arith.constant 0 : index
    %3 = vector.load %arg2[%c0, %c0_1, %c0_2] : memref<1x8x32xbf16, #tpu.memory_space<vmem>>, vector<1x8x32xbf16>
    %4 = vector.shape_cast %3 : vector<1x8x32xbf16> to vector<8x32xbf16>
    %c0_3 = arith.constant 0 : index
    %c0_4 = arith.constant 0 : index
    %5 = vector.load %arg4[%c0_3, %c0_4] : memref<32x32xbf16, #tpu.memory_space<vmem>>, vector<32x32xbf16>
    %cst = arith.constant dense<0.000000e+00> : vector<8x32xf32>
    %6 = tpu.matmul %4, %5, %cst {dimension_numbers = #tpu.dot_dimension_numbers<[1], [0], [0], [1], [0, 0, 1, 1], [], []>} : vector<8x32xbf16>, vector<32x32xbf16>, vector<8x32xf32> -> vector<8x32xf32>
    %c0_5 = arith.constant 0 : index
    %c0_6 = arith.constant 0 : index
    %7 = vector.load %arg5[%c0_5, %c0_6] : memref<1x32xf32, #tpu.memory_space<vmem>>, vector<1x32xf32>
    %8 = vector.broadcast %7 : vector<1x32xf32> to vector<8x32xf32>
    %9 = arith.addf %6, %8 : vector<8x32xf32>
    %10 = arith.truncf %9 : vector<8x32xf32> to vector<8x32xbf16>
    %c0_7 = arith.constant 0 : index
    %c0_8 = arith.constant 0 : index
    %11 = vector.load %arg13[%c0_7, %c0_8] : memref<10x32xbf16, #tpu.memory_space<vmem>>, vector<10x32xbf16>
    %c0_9 = arith.constant 0 : index
    %c0_10 = arith.constant 0 : index
    %12 = vector.load %arg14[%c0_9, %c0_10] : memref<10x32xbf16, #tpu.memory_space<vmem>>, vector<10x32xbf16>
    %cst_11 = arith.constant 0.000000e+00 : f32
    %13 = vector.broadcast %cst_11 : f32 to vector<8x32xf32>
    %14 = vector.extract_strided_slice %10 {offsets = [0, 0], sizes = [8, 16], strides = [1, 1]} : vector<8x32xbf16> to vector<8x16xbf16>
    %15 = vector.extract_strided_slice %11 {offsets = [0, 0], sizes = [10, 16], strides = [1, 1]} : vector<10x32xbf16> to vector<10x16xbf16>
    %16 = vector.extract_strided_slice %12 {offsets = [0, 0], sizes = [10, 16], strides = [1, 1]} : vector<10x32xbf16> to vector<10x16xbf16>
    %cst_12 = arith.constant dense<0.000000e+00> : vector<8x10xf32>
    %17 = tpu.matmul %14, %15, %cst_12 {dimension_numbers = #tpu.dot_dimension_numbers<[1], [1], [0], [0], [0, 0, 1, 0], [], []>} : vector<8x16xbf16>, vector<10x16xbf16>, vector<8x10xf32> -> vector<8x10xf32>
    %cst_13 = arith.constant dense<0xFF800000> : vector<8xf32>
    %18 = vector.multi_reduction <maximumf>, %17, %cst_13 [1] : vector<8x10xf32> to vector<8xf32>
    %19 = vector.shape_cast %18 : vector<8xf32> to vector<8x1xf32>
    %20 = vector.broadcast %19 : vector<8x1xf32> to vector<8x10xf32>
    %21 = arith.subf %17, %20 : vector<8x10xf32>
    %22 = math.exp %21 : vector<8x10xf32>
    %cst_14 = arith.constant dense<0.000000e+00> : vector<8xf32>
    %23 = vector.multi_reduction <add>, %22, %cst_14 [1] : vector<8x10xf32> to vector<8xf32>
    %24 = vector.shape_cast %23 : vector<8xf32> to vector<8x1xf32>
    %25 = tpu.reciprocal %24 {approx = true} : vector<8x1xf32> -> vector<8x1xf32>
    %26 = vector.broadcast %25 : vector<8x1xf32> to vector<8x10xf32>
    %27 = arith.mulf %22, %26 : vector<8x10xf32>
    %28 = arith.truncf %27 : vector<8x10xf32> to vector<8x10xbf16>
    %cst_15 = arith.constant dense<0.000000e+00> : vector<8x16xf32>
    %29 = tpu.matmul %28, %16, %cst_15 {dimension_numbers = #tpu.dot_dimension_numbers<[1], [0], [0], [1], [0, 0, 1, 1], [], []>} : vector<8x10xbf16>, vector<10x16xbf16>, vector<8x16xf32> -> vector<8x16xf32>
    %30 = arith.truncf %29 : vector<8x16xf32> to vector<8x16xbf16>
    %c0_16 = arith.constant 0 : index
    %c0_17 = arith.constant 0 : index
    %31 = vector.load %arg10[%c0_16, %c0_17] : memref<32x32xbf16, #tpu.memory_space<vmem>>, vector<16x32xbf16>
    %cst_18 = arith.constant dense<0.000000e+00> : vector<8x32xf32>
    %32 = tpu.matmul %30, %31, %cst_18 {dimension_numbers = #tpu.dot_dimension_numbers<[1], [0], [0], [1], [0, 0, 1, 1], [], []>} : vector<8x16xbf16>, vector<16x32xbf16>, vector<8x32xf32> -> vector<8x32xf32>
    %33 = arith.addf %13, %32 : vector<8x32xf32>
    %34 = vector.extract_strided_slice %10 {offsets = [0, 16], sizes = [8, 16], strides = [1, 1]} : vector<8x32xbf16> to vector<8x16xbf16>
    %35 = vector.extract_strided_slice %11 {offsets = [0, 16], sizes = [10, 16], strides = [1, 1]} : vector<10x32xbf16> to vector<10x16xbf16>
    %36 = vector.extract_strided_slice %12 {offsets = [0, 16], sizes = [10, 16], strides = [1, 1]} : vector<10x32xbf16> to vector<10x16xbf16>
    %cst_19 = arith.constant dense<0.000000e+00> : vector<8x10xf32>
    %37 = tpu.matmul %34, %35, %cst_19 {dimension_numbers = #tpu.dot_dimension_numbers<[1], [1], [0], [0], [0, 0, 1, 0], [], []>} : vector<8x16xbf16>, vector<10x16xbf16>, vector<8x10xf32> -> vector<8x10xf32>
    %cst_20 = arith.constant dense<0xFF800000> : vector<8xf32>
    %38 = vector.multi_reduction <maximumf>, %37, %cst_20 [1] : vector<8x10xf32> to vector<8xf32>
    %39 = vector.shape_cast %38 : vector<8xf32> to vector<8x1xf32>
    %40 = vector.broadcast %39 : vector<8x1xf32> to vector<8x10xf32>
    %41 = arith.subf %37, %40 : vector<8x10xf32>
    %42 = math.exp %41 : vector<8x10xf32>
    %cst_21 = arith.constant dense<0.000000e+00> : vector<8xf32>
    %43 = vector.multi_reduction <add>, %42, %cst_21 [1] : vector<8x10xf32> to vector<8xf32>
    %44 = vector.shape_cast %43 : vector<8xf32> to vector<8x1xf32>
    %45 = tpu.reciprocal %44 {approx = true} : vector<8x1xf32> -> vector<8x1xf32>
    %46 = vector.broadcast %45 : vector<8x1xf32> to vector<8x10xf32>
    %47 = arith.mulf %42, %46 : vector<8x10xf32>
    %48 = arith.truncf %47 : vector<8x10xf32> to vector<8x10xbf16>
    %cst_22 = arith.constant dense<0.000000e+00> : vector<8x16xf32>
    %49 = tpu.matmul %48, %36, %cst_22 {dimension_numbers = #tpu.dot_dimension_numbers<[1], [0], [0], [1], [0, 0, 1, 1], [], []>} : vector<8x10xbf16>, vector<10x16xbf16>, vector<8x16xf32> -> vector<8x16xf32>
    %50 = arith.truncf %49 : vector<8x16xf32> to vector<8x16xbf16>
    %c16 = arith.constant 16 : index
    %c0_23 = arith.constant 0 : index
    %51 = vector.load %arg10[%c16, %c0_23] : memref<32x32xbf16, #tpu.memory_space<vmem>>, vector<16x32xbf16>
    %cst_24 = arith.constant dense<0.000000e+00> : vector<8x32xf32>
    %52 = tpu.matmul %50, %51, %cst_24 {dimension_numbers = #tpu.dot_dimension_numbers<[1], [0], [0], [1], [0, 0, 1, 1], [], []>} : vector<8x16xbf16>, vector<16x32xbf16>, vector<8x32xf32> -> vector<8x32xf32>
    %53 = arith.addf %33, %52 : vector<8x32xf32>
    %c0_25 = arith.constant 0 : index
    %c0_26 = arith.constant 0 : index
    %54 = vector.load %arg11[%c0_25, %c0_26] : memref<1x32xf32, #tpu.memory_space<vmem>>, vector<1x32xf32>
    %55 = vector.broadcast %54 : vector<1x32xf32> to vector<8x32xf32>
    %56 = arith.addf %53, %55 : vector<8x32xf32>
    %c0_27 = arith.constant 0 : index
    %c0_28 = arith.constant 0 : index
    %c0_29 = arith.constant 0 : index
    %57 = vector.load %arg12[%c0_27, %c0_28, %c0_29] : memref<1x8x32xf32, #tpu.memory_space<vmem>>, vector<1x8x32xf32>
    %58 = vector.shape_cast %57 : vector<1x8x32xf32> to vector<8x32xf32>
    %59 = vector.shape_cast %56 : vector<8x32xf32> to vector<1x8x32xf32>
    tpu.vector_store %arg12[%c0_27, %c0_28, %c0_29], %59 {strides = array<i32>} : memref<1x8x32xf32, #tpu.memory_space<vmem>>, vector<1x8x32xf32>,
    return
  }
  func.func @transform_0(%arg0: i32, %arg1: i32) -> (i32, i32, i32) {
    %c0_i32 = arith.constant 0 : i32
    %c0_i32_0 = arith.constant 0 : i32
    return %arg0, %arg1, %c0_i32 : i32, i32, i32
  }
  func.func @transform_1(%arg0: i32, %arg1: i32) -> (i32, i32, i32) {
    %c0_i32 = arith.constant 0 : i32
    %c0_i32_0 = arith.constant 0 : i32
    %c0_i32_1 = arith.constant 0 : i32
    return %arg0, %c0_i32, %c0_i32_0 : i32, i32, i32
  }
  func.func @transform_2(%arg0: i32, %arg1: i32) -> (i32, i32) {
    %c0_i32 = arith.constant 0 : i32
    %c0_i32_0 = arith.constant 0 : i32
    %c0_i32_1 = arith.constant 0 : i32
    return %c0_i32, %c0_i32_0 : i32, i32
  }
  func.func @transform_3(%arg0: i32, %arg1: i32) -> (i32, i32) {
    %c0_i32 = arith.constant 0 : i32
    %c0_i32_0 = arith.constant 0 : i32
    %c0_i32_1 = arith.constant 0 : i32
    return %c0_i32, %c0_i32_0 : i32, i32
  }
  func.func @transform_4(%arg0: i32, %arg1: i32) -> (i32, i32) {
    %c0_i32 = arith.constant 0 : i32
    %c0_i32_0 = arith.constant 0 : i32
    %c0_i32_1 = arith.constant 0 : i32
    return %c0_i32, %c0_i32_0 : i32, i32
  }
  func.func @transform_5(%arg0: i32, %arg1: i32) -> (i32, i32) {
    %c0_i32 = arith.constant 0 : i32
    %c0_i32_0 = arith.constant 0 : i32
    %c0_i32_1 = arith.constant 0 : i32
    return %c0_i32, %c0_i32_0 : i32, i32
  }
  func.func @transform_6(%arg0: i32, %arg1: i32) -> (i32, i32) {
    %c0_i32 = arith.constant 0 : i32
    %c0_i32_0 = arith.constant 0 : i32
    %c0_i32_1 = arith.constant 0 : i32
    return %c0_i32, %c0_i32_0 : i32, i32
  }
  func.func @transform_7(%arg0: i32, %arg1: i32) -> (i32, i32) {
    %c0_i32 = arith.constant 0 : i32
    %c0_i32_0 = arith.constant 0 : i32
    %c0_i32_1 = arith.constant 0 : i32
    return %c0_i32, %c0_i32_0 : i32, i32
  }
  func.func @transform_8(%arg0: i32, %arg1: i32) -> (i32, i32) {
    %c0_i32 = arith.constant 0 : i32
    %c0_i32_0 = arith.constant 0 : i32
    %c0_i32_1 = arith.constant 0 : i32
    return %c0_i32, %c0_i32_0 : i32, i32
  }
  func.func @transform_9(%arg0: i32, %arg1: i32) -> (i32, i32) {
    %c0_i32 = arith.constant 0 : i32
    %c0_i32_0 = arith.constant 0 : i32
    %c0_i32_1 = arith.constant 0 : i32
    return %c0_i32, %c0_i32_0 : i32, i32
  }
  func.func @transform_10(%arg0: i32, %arg1: i32) -> (i32, i32, i32) {
    %c0_i32 = arith.constant 0 : i32
    %c0_i32_0 = arith.constant 0 : i32
    return %arg0, %arg1, %c0_i32 : i32, i32, i32
  }
}

</mosaic_0001>

<llo_original>
// kernel: tpu_custom_call.1
$region0: #{tpu_custom_call.1}
  #allocation0 [shape = 'u32[]', space=smem, size = 0x4, offset = 0x4, fixed_abs, tag = 'smem constant byte address 0x4 - core index']
  #allocation1 [shape = 'u32[144,128]{1,0:T(1,128)}', space=vmem, size = 0x12000, scoped, tag = 'internal scratch']
  #allocation2 [shape = 'bf16[10,32]{1,0:T(8,128)(2,1)}', space=vmem, size = 0x1000, scoped, tag = 'scratch operand']
  #allocation3 [shape = 'bf16[10,32]{1,0:T(8,128)(2,1)}', space=vmem, size = 0x1000, scoped, tag = 'scratch operand']
  %s0 = inlined_call_operand.hbm [shape: bf16[2,8,32], index: 0, kind: input, shape index: {}]
  %s1 = inlined_call_operand.vmem [shape: bf16[2,10,16], index: 1, kind: input, shape index: {}]
  %s2 = inlined_call_operand.vmem [shape: bf16[32,32], index: 2, kind: input, shape index: {}]
  %s3 = inlined_call_operand.hbm [shape: f32[1,32], index: 3, kind: input, shape index: {}]
  %s4 = inlined_call_operand.vmem [shape: bf16[16,32], index: 4, kind: input, shape index: {}]
  %s5 = inlined_call_operand.hbm [shape: f32[1,32], index: 5, kind: input, shape index: {}]
  %s6 = inlined_call_operand.vmem [shape: bf16[16,32], index: 6, kind: input, shape index: {}]
  %s7 = inlined_call_operand.vmem [shape: f32[1,32], index: 7, kind: input, shape index: {}]
  %s8 = inlined_call_operand.vmem [shape: bf16[32,32], index: 8, kind: input, shape index: {}]
  %s9 = inlined_call_operand.vmem [shape: f32[1,32], index: 9, kind: input, shape index: {}]
  %s10 = inlined_call_operand.hbm [shape: f32[2,8,32], index: 10, kind: output, shape index: {}]
  %s11 = sld [smem:[#allocation0]]
  $region89: #{tpu_custom_call.1} parent=0
    _
  %s13 = ssub.s32 1, %s11
  %s14 = scalar_select 0, %s13, %s11
  $region1: #{tpu_custom_call.1} parent=0
    #allocation4 [shape = 'u8[4096]{0}', space=vmem, size = 0x1000, scoped, tag = 'input window, operand 0']
    #allocation5 [shape = 's32[2]{0}', space=sflag, size = 0x8, scoped, tag = 'scoped memory for tpu_custom_call.1']
    #allocation6 [shape = 's32[2]{0}', space=sflag, size = 0x8, scoped, tag = 'scoped memory for tpu_custom_call.1']
    #allocation7 [shape = 'u8[512]{0}', space=vmem, size = 0x400, scoped, tag = 'input window, operand 3, single buffered']
    #allocation8 [shape = 's32[1]{0}', space=sflag, size = 0x4, scoped, tag = 'scoped memory for tpu_custom_call.1']
    #allocation9 [shape = 'u8[512]{0}', space=vmem, size = 0x400, scoped, tag = 'input window, operand 5, single buffered']
    #allocation10 [shape = 'u8[8192]{0}', space=vmem, size = 0x2000, scoped, tag = 'output window, operand 0']
    %15 = vsyncpa [#allocation5], 0
    %s16 = scalar_lea.sflag [#allocation5], 1
    %17 = vsyncpa %s16, 0
    %18 = vsyncpa [#allocation8], 0
    %19 = vsyncpa [#allocation6], 0
    %s20 = scalar_lea.sflag [#allocation6], 1
    %21 = vsyncpa %s20, 0
    loop: start=0, step=1, limit=4
    $region2: #{tpu_custom_call.1} parent=1 // loop_pre_header
      _
    $region3: #{tpu_custom_call.1} parent=1 // loop_header
      %s23 = sphi 0, %s27
      %p24 = scmp.ge.s32.totalorder %s23, 4
      %s30 = sphi 0, %s42
      %s31 = sphi 0, %s38
      %s32 = sphi 0, %s30
      %s33 = sphi 0, %s31
      %s34 = sphi 0, %s32
      %s35 = sphi 0, %s33
      %s47 = sphi 0, %s49
      %s50 = sphi 0, %s47
      %s51 = sphi 0, %s50
      %s67 = sphi 0, %s51
      %s73 = sphi 0, %s75
      %s76 = sphi 0, %s73
      %s77 = sphi 0, %s76
      %s93 = sphi 0, %s77
      %s97 = sphi 0, %s97
      %s99 = sphi 0, %s97
      %s100 = sphi 0, %s99
      %s114 = sphi 0, %s100
      %s118 = sphi 0, %s118
      %s120 = sphi 0, %s118
      %s121 = sphi 0, %s120
      %s135 = sphi 0, %s121
      %s139 = sphi 0, %s139
      %s141 = sphi 0, %s139
      %s142 = sphi 0, %s141
      %s156 = sphi 0, %s142
      %s160 = sphi 0, %s160
      %s162 = sphi 0, %s160
      %s163 = sphi 0, %s162
      %s177 = sphi 0, %s163
      %s181 = sphi 0, %s181
      %s183 = sphi 0, %s181
      %s184 = sphi 0, %s183
      %s198 = sphi 0, %s184
      %s202 = sphi 0, %s202
      %s204 = sphi 0, %s202
      %s205 = sphi 0, %s204
      %s219 = sphi 0, %s205
      %s223 = sphi 0, %s223
      %s225 = sphi 0, %s223
      %s226 = sphi 0, %s225
      %s240 = sphi 0, %s226
      %s244 = sphi 0, %s244
      %s246 = sphi 0, %s244
      %s247 = sphi 0, %s246
      %s261 = sphi 0, %s247
      %s269 = sphi 0, %s271
      %s272 = sphi 0, %s269
      %s273 = sphi 0, %s272
      %s289 = sphi 0, %s273
    $region4: #{tpu_custom_call.1} parent=1 // loop_header_branch
      %26 = sbr.rel (%p24) target = $region8
    $region5: #{tpu_custom_call.1} parent=1 // loop_body
      %s28 = ssub.s32 %s23, 1
      %s29 = ssub.s32 %s23, 2
      %s36 = sadd.s32 1, %s31
      %p37 = scmp.ge.s32.totalorder %s36, 1
      %s38 = scalar_select %p37, 0, %s36
      %s39 = sadd.s32 1, %s30
      %s40 = scalar_select %p37, %s39, %s30
      %p41 = scmp.ge.s32.totalorder %s40, 2
      %s42 = scalar_select %p41, 0, %s40
      %s43 = ssub.s32 %s30, %s42
      %s44 = ssub.s32 %s31, %s38
      %s45 = sor.u32 %s43, %s44
      %p46 = scmp.eq.s32.totalorder %s45, 0
      %s48 = sadd.s32 %s47, 1
      %s49 = scalar_select %p46, %s47, %s48
      %p52 = pneg %p46
      %p53 = scmp.eq.s32.totalorder %s23, 1
      %p54 = por %p52, %p53
      %p55 = scmp.ne.s32.totalorder %s47, %s50
      %p56 = scmp.eq.s32.totalorder %s23, 0
      %p57 = por %p55, %p56
      %p58 = scmp.ne.s32.totalorder %s47, %s50
      %p59 = scmp.eq.s32.totalorder %s28, 1
      %p60 = por %p58, %p59
      %p61 = scmp.ne.s32.totalorder %s50, %s51
      %p62 = scmp.eq.s32.totalorder %s28, 0
      %p63 = por %p61, %p62
      %p64 = scmp.ne.s32.totalorder %s50, %s51
      %p65 = scmp.eq.s32.totalorder %s29, 1
      %p66 = por %p64, %p65
      %p68 = scmp.ne.s32.totalorder %s51, %s67
      %p69 = scmp.eq.s32.totalorder %s29, 0
      %p70 = por %p68, %p69
      %s71 = ssub.s32 %s30, %s42
      %p72 = scmp.eq.s32.totalorder %s71, 0
      %s74 = sadd.s32 %s73, 1
      %s75 = scalar_select %p72, %s73, %s74
      %p78 = pneg %p72
      %p79 = scmp.eq.s32.totalorder %s23, 1
      %p80 = por %p78, %p79
      %p81 = scmp.ne.s32.totalorder %s73, %s76
      %p82 = scmp.eq.s32.totalorder %s23, 0
      %p83 = por %p81, %p82
      %p84 = scmp.ne.s32.totalorder %s73, %s76
      %p85 = scmp.eq.s32.totalorder %s28, 1
      %p86 = por %p84, %p85
      %p87 = scmp.ne.s32.totalorder %s76, %s77
      %p88 = scmp.eq.s32.totalorder %s28, 0
      %p89 = por %p87, %p88
      %p90 = scmp.ne.s32.totalorder %s76, %s77
      %p91 = scmp.eq.s32.totalorder %s29, 1
      %p92 = por %p90, %p91
      %p94 = scmp.ne.s32.totalorder %s77, %s93
      %p95 = scmp.eq.s32.totalorder %s29, 0
      %p96 = por %p94, %p95
      %s98 = sadd.s32 %s97, 1
      %p101 = scmp.eq.s32.totalorder %s23, 1
      %p102 = scmp.ne.s32.totalorder %s97, %s99
      %p103 = scmp.eq.s32.totalorder %s23, 0
      %p104 = por %p102, %p103
      %p105 = scmp.ne.s32.totalorder %s97, %s99
      %p106 = scmp.eq.s32.totalorder %s28, 1
      %p107 = por %p105, %p106
      %p108 = scmp.ne.s32.totalorder %s99, %s100
      %p109 = scmp.eq.s32.totalorder %s28, 0
      %p110 = por %p108, %p109
      %p111 = scmp.ne.s32.totalorder %s99, %s100
      %p112 = scmp.eq.s32.totalorder %s29, 1
      %p113 = por %p111, %p112
      %p115 = scmp.ne.s32.totalorder %s100, %s114
      %p116 = scmp.eq.s32.totalorder %s29, 0
      %p117 = por %p115, %p116
      %s119 = sadd.s32 %s118, 1
      %p122 = scmp.eq.s32.totalorder %s23, 1
      %p123 = scmp.ne.s32.totalorder %s118, %s120
      %p124 = scmp.eq.s32.totalorder %s23, 0
      %p125 = por %p123, %p124
      %p126 = scmp.ne.s32.totalorder %s118, %s120
      %p127 = scmp.eq.s32.totalorder %s28, 1
      %p128 = por %p126, %p127
      %p129 = scmp.ne.s32.totalorder %s120, %s121
      %p130 = scmp.eq.s32.totalorder %s28, 0
      %p131 = por %p129, %p130
      %p132 = scmp.ne.s32.totalorder %s120, %s121
      %p133 = scmp.eq.s32.totalorder %s29, 1
      %p134 = por %p132, %p133
      %p136 = scmp.ne.s32.totalorder %s121, %s135
      %p137 = scmp.eq.s32.totalorder %s29, 0
      %p138 = por %p136, %p137
      %s140 = sadd.s32 %s139, 1
      %p143 = scmp.eq.s32.totalorder %s23, 1
      %p144 = scmp.ne.s32.totalorder %s139, %s141
      %p145 = scmp.eq.s32.totalorder %s23, 0
      %p146 = por %p144, %p145
      %p147 = scmp.ne.s32.totalorder %s139, %s141
      %p148 = scmp.eq.s32.totalorder %s28, 1
      %p149 = por %p147, %p148
      %p150 = scmp.ne.s32.totalorder %s141, %s142
      %p151 = scmp.eq.s32.totalorder %s28, 0
      %p152 = por %p150, %p151
      %p153 = scmp.ne.s32.totalorder %s141, %s142
      %p154 = scmp.eq.s32.totalorder %s29, 1
      %p155 = por %p153, %p154
      %p157 = scmp.ne.s32.totalorder %s142, %s156
      %p158 = scmp.eq.s32.totalorder %s29, 0
      %p159 = por %p157, %p158
      %s161 = sadd.s32 %s160, 1
      %p164 = scmp.eq.s32.totalorder %s23, 1
      %p165 = scmp.ne.s32.totalorder %s160, %s162
      %p166 = scmp.eq.s32.totalorder %s23, 0
      %p167 = por %p165, %p166
      %p168 = scmp.ne.s32.totalorder %s160, %s162
      %p169 = scmp.eq.s32.totalorder %s28, 1
      %p170 = por %p168, %p169
      %p171 = scmp.ne.s32.totalorder %s162, %s163
      %p172 = scmp.eq.s32.totalorder %s28, 0
      %p173 = por %p171, %p172
      %p174 = scmp.ne.s32.totalorder %s162, %s163
      %p175 = scmp.eq.s32.totalorder %s29, 1
      %p176 = por %p174, %p175
      %p178 = scmp.ne.s32.totalorder %s163, %s177
      %p179 = scmp.eq.s32.totalorder %s29, 0
      %p180 = por %p178, %p179
      %s182 = sadd.s32 %s181, 1
      %p185 = scmp.eq.s32.totalorder %s23, 1
      %p186 = scmp.ne.s32.totalorder %s181, %s183
      %p187 = scmp.eq.s32.totalorder %s23, 0
      %p188 = por %p186, %p187
      %p189 = scmp.ne.s32.totalorder %s181, %s183
      %p190 = scmp.eq.s32.totalorder %s28, 1
      %p191 = por %p189, %p190
      %p192 = scmp.ne.s32.totalorder %s183, %s184
      %p193 = scmp.eq.s32.totalorder %s28, 0
      %p194 = por %p192, %p193
      %p195 = scmp.ne.s32.totalorder %s183, %s184
      %p196 = scmp.eq.s32.totalorder %s29, 1
      %p197 = por %p195, %p196
      %p199 = scmp.ne.s32.totalorder %s184, %s198
      %p200 = scmp.eq.s32.totalorder %s29, 0
      %p201 = por %p199, %p200
      %s203 = sadd.s32 %s202, 1
      %p206 = scmp.eq.s32.totalorder %s23, 1
      %p207 = scmp.ne.s32.totalorder %s202, %s204
      %p208 = scmp.eq.s32.totalorder %s23, 0
      %p209 = por %p207, %p208
      %p210 = scmp.ne.s32.totalorder %s202, %s204
      %p211 = scmp.eq.s32.totalorder %s28, 1
      %p212 = por %p210, %p211
      %p213 = scmp.ne.s32.totalorder %s204, %s205
      %p214 = scmp.eq.s32.totalorder %s28, 0
      %p215 = por %p213, %p214
      %p216 = scmp.ne.s32.totalorder %s204, %s205
      %p217 = scmp.eq.s32.totalorder %s29, 1
      %p218 = por %p216, %p217
      %p220 = scmp.ne.s32.totalorder %s205, %s219
      %p221 = scmp.eq.s32.totalorder %s29, 0
      %p222 = por %p220, %p221
      %s224 = sadd.s32 %s223, 1
      %p227 = scmp.eq.s32.totalorder %s23, 1
      %p228 = scmp.ne.s32.totalorder %s223, %s225
      %p229 = scmp.eq.s32.totalorder %s23, 0
      %p230 = por %p228, %p229
      %p231 = scmp.ne.s32.totalorder %s223, %s225
      %p232 = scmp.eq.s32.totalorder %s28, 1
      %p233 = por %p231, %p232
      %p234 = scmp.ne.s32.totalorder %s225, %s226
      %p235 = scmp.eq.s32.totalorder %s28, 0
      %p236 = por %p234, %p235
      %p237 = scmp.ne.s32.totalorder %s225, %s226
      %p238 = scmp.eq.s32.totalorder %s29, 1
      %p239 = por %p237, %p238
      %p241 = scmp.ne.s32.totalorder %s226, %s240
      %p242 = scmp.eq.s32.totalorder %s29, 0
      %p243 = por %p241, %p242
      %s245 = sadd.s32 %s244, 1
      %p248 = scmp.eq.s32.totalorder %s23, 1
      %p249 = scmp.ne.s32.totalorder %s244, %s246
      %p250 = scmp.eq.s32.totalorder %s23, 0
      %p251 = por %p249, %p250
      %p252 = scmp.ne.s32.totalorder %s244, %s246
      %p253 = scmp.eq.s32.totalorder %s28, 1
      %p254 = por %p252, %p253
      %p255 = scmp.ne.s32.totalorder %s246, %s247
      %p256 = scmp.eq.s32.totalorder %s28, 0
      %p257 = por %p255, %p256
      %p258 = scmp.ne.s32.totalorder %s246, %s247
      %p259 = scmp.eq.s32.totalorder %s29, 1
      %p260 = por %p258, %p259
      %p262 = scmp.ne.s32.totalorder %s247, %s261
      %p263 = scmp.eq.s32.totalorder %s29, 0
      %p264 = por %p262, %p263
      %s265 = ssub.s32 %s30, %s42
      %s266 = ssub.s32 %s31, %s38
      %s267 = sor.u32 %s265, %s266
      %p268 = scmp.eq.s32.totalorder %s267, 0
      %s270 = sadd.s32 %s269, 1
      %s271 = scalar_select %p268, %s269, %s270
      %p274 = pneg %p268
      %p275 = scmp.eq.s32.totalorder %s23, 1
      %p276 = por %p274, %p275
      %p277 = scmp.ne.s32.totalorder %s269, %s272
      %p278 = scmp.eq.s32.totalorder %s23, 0
      %p279 = por %p277, %p278
      %p280 = scmp.ne.s32.totalorder %s269, %s272
      %p281 = scmp.eq.s32.totalorder %s28, 1
      %p282 = por %p280, %p281
      %p283 = scmp.ne.s32.totalorder %s272, %s273
      %p284 = scmp.eq.s32.totalorder %s28, 0
      %p285 = por %p283, %p284
      %p286 = scmp.ne.s32.totalorder %s272, %s273
      %p287 = scmp.eq.s32.totalorder %s29, 1
      %p288 = por %p286, %p287
      %p290 = scmp.ne.s32.totalorder %s273, %s289
      %p291 = scmp.eq.s32.totalorder %s29, 0
      %p292 = por %p290, %p291
      %p293 = scmp.le.s32.totalorder 1, %s23
      %p294 = scmp.lt.s32.totalorder %s23, 3
      %p295 = pnand %p293, %p294
      %p296 = pneg %p295
      // Predicated region
      $region9: #{tpu_custom_call.1} parent=5 // pred_check
        _
      $region10: #{tpu_custom_call.1} parent=5 // pred_check_branch
        %298 = sbr.rel (%p295) target = $region12
      $region11: #{tpu_custom_call.1} parent=5 // pred_region
        %s299 = ssub.s32 %s23, 1
        // Predicated region
        $region13: #{tpu_custom_call.1} parent=11 // pred_check
          %p300 = pneg %p110
        $region14: #{tpu_custom_call.1} parent=11 // pred_check_branch
          %302 = sbr.rel (%p300) target = $region16
        $region15: #{tpu_custom_call.1} parent=11 // pred_region
          _
        $region16: #{tpu_custom_call.1} parent=11 // pred_fallthru
          _
        // Predicated region
        $region17: #{tpu_custom_call.1} parent=11 // pred_check
          %p303 = pneg %p131
        $region18: #{tpu_custom_call.1} parent=11 // pred_check_branch
          %305 = sbr.rel (%p303) target = $region20
        $region19: #{tpu_custom_call.1} parent=11 // pred_region
          %s307 = ssub.s32 16, 16
          %308 = vsyncadd [#allocation8], %s307
          %s310 = sshll.u32 [#allocation7], 4
          %s311 = int_to_ptr.vmem [resolvable:$true] %s310
          %313 = dma.hbm_to_vmem [thread:$0]  %s3, 16, %s311, [#allocation8]
        $region20: #{tpu_custom_call.1} parent=11 // pred_fallthru
          _
        // Predicated region
        $region21: #{tpu_custom_call.1} parent=11 // pred_check
          %p314 = pneg %p152
        $region22: #{tpu_custom_call.1} parent=11 // pred_check_branch
          %316 = sbr.rel (%p314) target = $region24
        $region23: #{tpu_custom_call.1} parent=11 // pred_region
          _
        $region24: #{tpu_custom_call.1} parent=11 // pred_fallthru
          _
        // Predicated region
        $region25: #{tpu_custom_call.1} parent=11 // pred_check
          %p317 = pneg %p173
        $region26: #{tpu_custom_call.1} parent=11 // pred_check_branch
          %319 = sbr.rel (%p317) target = $region28
        $region27: #{tpu_custom_call.1} parent=11 // pred_region
          %s321 = ssub.s32 16, 16
          %322 = vsyncadd [#allocation8], %s321
          %s324 = sshll.u32 [#allocation9], 4
          %s325 = int_to_ptr.vmem [resolvable:$true] %s324
          %327 = dma.hbm_to_vmem [thread:$0]  %s5, 16, %s325, [#allocation8]
        $region28: #{tpu_custom_call.1} parent=11 // pred_fallthru
          _
        // Predicated region
        $region29: #{tpu_custom_call.1} parent=11 // pred_check
          %p328 = pneg %p194
        $region30: #{tpu_custom_call.1} parent=11 // pred_check_branch
          %330 = sbr.rel (%p328) target = $region32
        $region31: #{tpu_custom_call.1} parent=11 // pred_region
          _
        $region32: #{tpu_custom_call.1} parent=11 // pred_fallthru
          _
        // Predicated region
        $region33: #{tpu_custom_call.1} parent=11 // pred_check
          %p331 = pneg %p215
        $region34: #{tpu_custom_call.1} parent=11 // pred_check_branch
          %333 = sbr.rel (%p331) target = $region36
        $region35: #{tpu_custom_call.1} parent=11 // pred_region
          _
        $region36: #{tpu_custom_call.1} parent=11 // pred_fallthru
          _
        // Predicated region
        $region37: #{tpu_custom_call.1} parent=11 // pred_check
          %p334 = pneg %p236
        $region38: #{tpu_custom_call.1} parent=11 // pred_check_branch
          %336 = sbr.rel (%p334) target = $region40
        $region39: #{tpu_custom_call.1} parent=11 // pred_region
          _
        $region40: #{tpu_custom_call.1} parent=11 // pred_fallthru
          _
        // Predicated region
        $region41: #{tpu_custom_call.1} parent=11 // pred_check
          %p337 = pneg %p257
        $region42: #{tpu_custom_call.1} parent=11 // pred_check_branch
          %339 = sbr.rel (%p337) target = $region44
        $region43: #{tpu_custom_call.1} parent=11 // pred_region
          _
        $region44: #{tpu_custom_call.1} parent=11 // pred_fallthru
          _
      $region12: #{tpu_custom_call.1} parent=5 // pred_fallthru
        _
      %p340 = scmp.lt.s32.totalorder %s23, 2
      // Predicated region
      $region45: #{tpu_custom_call.1} parent=5 // pred_check
        %p341 = pneg %p340
      $region46: #{tpu_custom_call.1} parent=5 // pred_check_branch
        %343 = sbr.rel (%p341) target = $region48
      $region47: #{tpu_custom_call.1} parent=5 // pred_region
        // Predicated region
        $region49: #{tpu_custom_call.1} parent=47 // pred_check
          %p344 = pneg %p57
        $region50: #{tpu_custom_call.1} parent=47 // pred_check_branch
          %346 = sbr.rel (%p344) target = $region52
        $region51: #{tpu_custom_call.1} parent=47 // pred_region
          %s347 = sand.u32 %s47, 1
          %s348 = scalar_lea.sflag [#allocation5], %s347
          %s349 = sand.u32 %s47, 1
          %s350 = smul.addr %s349, 4
          %s351 = scalar_lea.vmem [#allocation4], %s350
          %s353 = ssub.s32 64, 64
          %354 = vsyncadd %s348, %s353
          %s355 = sadd.s32 %s31, %s30
          %s356 = smul.addr %s355, 64
          %s357 = scalar_lea.hbm %s0, %s356
          %s359 = sshll.u32 %s351, 4
          %s360 = int_to_ptr.vmem [resolvable:$true] %s359
          %362 = dma.hbm_to_vmem [thread:$0]  %s357, 64, %s360, %s348
        $region52: #{tpu_custom_call.1} parent=47 // pred_fallthru
          _
        // Predicated region
        $region53: #{tpu_custom_call.1} parent=47 // pred_check
          %p363 = pneg %p83
        $region54: #{tpu_custom_call.1} parent=47 // pred_check_branch
          %365 = sbr.rel (%p363) target = $region56
        $region55: #{tpu_custom_call.1} parent=47 // pred_region
          %p366 = scmp.lt.s32.totalorder %s30, 1
          %s367 = scalar_select %p366, %s30, 1
          %s368 = smul.addr %s367, 2
          %s369 = smul.addr %s368, 4
          %s370 = scalar_lea.vmem %s1, %s369
        $region56: #{tpu_custom_call.1} parent=47 // pred_fallthru
          _
      $region48: #{tpu_custom_call.1} parent=5 // pred_fallthru
        _
      %p371 = scmp.le.s32.totalorder 1, %s23
      %p372 = scmp.lt.s32.totalorder %s23, 3
      %p373 = pnand %p371, %p372
      %p374 = pneg %p373
      // Predicated region
      $region57: #{tpu_custom_call.1} parent=5 // pred_check
        _
      $region58: #{tpu_custom_call.1} parent=5 // pred_check_branch
        %376 = sbr.rel (%p373) target = $region60
      $region59: #{tpu_custom_call.1} parent=5 // pred_region
        %s377 = ssub.s32 %s23, 1
        %s378 = sand.u32 %s50, 1
        %s379 = scalar_lea.sflag [#allocation5], %s378
        %s380 = sand.u32 %s50, 1
        %s381 = smul.addr %s380, 4
        %s382 = scalar_lea.vmem [#allocation4], %s381
        // Predicated region
        $region61: #{tpu_custom_call.1} parent=59 // pred_check
          %p383 = pneg %p63
        $region62: #{tpu_custom_call.1} parent=59 // pred_check_branch
          %385 = sbr.rel (%p383) target = $region64
        $region63: #{tpu_custom_call.1} parent=59 // pred_region
          %386 = dma.done %s379, 64
        $region64: #{tpu_custom_call.1} parent=59 // pred_fallthru
          _
        // Predicated region
        $region65: #{tpu_custom_call.1} parent=59 // pred_check
          %p387 = pneg %p131
        $region66: #{tpu_custom_call.1} parent=59 // pred_check_branch
          %389 = sbr.rel (%p387) target = $region68
        $region67: #{tpu_custom_call.1} parent=59 // pred_region
          %390 = dma.done [#allocation8], 16
        $region68: #{tpu_custom_call.1} parent=59 // pred_fallthru
          _
        // Predicated region
        $region69: #{tpu_custom_call.1} parent=59 // pred_check
          %p391 = pneg %p173
        $region70: #{tpu_custom_call.1} parent=59 // pred_check_branch
          %393 = sbr.rel (%p391) target = $region72
        $region71: #{tpu_custom_call.1} parent=59 // pred_region
          %394 = dma.done [#allocation8], 16
        $region72: #{tpu_custom_call.1} parent=59 // pred_fallthru
          _
        %s395 = sand.u32 %s50, 1
        %s396 = scalar_lea.sflag [#allocation5], %s395
        %s397 = sand.u32 %s50, 1
        %s398 = smul.addr %s397, 4
        %s399 = scalar_lea.vmem [#allocation4], %s398
        %p400 = pneg %p63
        %p401 = pneg %p60
        %p402 = scmp.lt.s32.totalorder %s32, 1
        %s403 = scalar_select %p402, %s32, 1
        %s404 = smul.addr %s403, 2
        %s405 = smul.addr %s404, 4
        %s406 = scalar_lea.vmem %s1, %s405
        %p407 = pneg %p89
        %p408 = pneg %p86
        %p409 = pneg %p110
        %p410 = pneg %p107
        %p411 = pneg %p131
        %p412 = pneg %p128
        %p413 = pneg %p152
        %p414 = pneg %p149
        %p415 = pneg %p173
        %p416 = pneg %p170
        %p417 = pneg %p194
        %p418 = pneg %p191
        %p419 = pneg %p215
        %p420 = pneg %p212
        %p421 = pneg %p236
        %p422 = pneg %p233
        %p423 = pneg %p257
        %p424 = pneg %p254
        %p425 = pneg %p285
        %p426 = pneg %p282
        %s427 = sand.u32 %s272, 1
        %s428 = scalar_lea.sflag [#allocation6], %s427
        %s429 = sand.u32 %s272, 1
        %s430 = smul.addr %s429, 8
        %s431 = scalar_lea.vmem [#allocation10], %s430
        %p432 = scmp.lt.s32.totalorder %s32, 1
        %s433 = scalar_select %p432, %s32, 1
        %s434 = smul.addr %s433, 2
        %s435 = smul.addr %s434, 4
        %s436 = scalar_lea.vmem %s1, %s435
        %p438 = scmp.eq.s32.totalorder %s33, 0
        // Predicated region
        $region73: #{tpu_custom_call.1} parent=59 // pred_check
          %p439 = pneg %p438
        $region74: #{tpu_custom_call.1} parent=59 // pred_check_branch
          %441 = sbr.rel (%p439) target = $region76
        $region75: #{tpu_custom_call.1} parent=59 // pred_region
          %v442 = vld [vmem:[%s436] sm:$0xf]
          %v443 = vld [vmem:[%s436 + $0x4] sm:$0x1]
          %v444 = vld [vmem:[%s4] sm:$0xf]
          %v445 = vld [vmem:[%s4 + $0x4] sm:$0xf]
          %v446 = vld [vmem:[#allocation9] sm:$0x1]
          %v448 = vlaneseq
          %v449 = vshrl.u32 %v448, 7
          %v450 = vsub.s32 0, %v449
          %v451 = vrot.slane %v446, %v450
          %v455 = vunpack.c.l.b16 %v442
          %v456 = vunpack.c.l.b16 %v443
          %v457 = vpack.c.b16 %v456, %v455
          %v460 = vunpack.c.l.b16 %v444
          %v461 = vunpack.c.l.b16 %v445
          %v462 = vpack.c.b16 %v461, %v460
          %vm464 = vcmask 130048
          %v466 = vsel %vm464, %v457, 0
          %468 = vmatprep.subr.bf16.mxu0 0
          %469 = vmatpush1.bf16.msra.mxu0 %v462
          %470 = vmatprep.subr.bf16.mxu0 0
          %471 = vmatpush1.bf16.msra.mxu0 0
          %472 = vmatprep.subr.bf16.mxu0 0
          %473 = vmatpush1.bf16.msra.mxu0 0
          %474 = vmatprep.subr.bf16.mxu0 0
          %475 = vmatpush1.bf16.msra.mxu0 0
          %476 = vmatprep.subr.bf16.mxu0 0
          %477 = vmatpush1.bf16.msra.mxu0 0
          %478 = vmatprep.subr.bf16.mxu0 0
          %479 = vmatpush1.bf16.msra.mxu0 0
          %480 = vmatprep.subr.bf16.mxu0 0
          %481 = vmatpush1.bf16.msra.mxu0 0
          %482 = vmatprep.subr.bf16.mxu0 0
          %483 = vmatpush1.bf16.msra.mxu0 0
          %484 = vmatprep.subr.bf16.mxu0 0
          %485 = vmatpush1.bf16.msra.mxu0 0
          %486 = vmatprep.subr.bf16.mxu0 0
          %487 = vmatpush1.bf16.msra.mxu0 0
          %488 = vmatprep.subr.bf16.mxu0 0
          %489 = vmatpush1.bf16.msra.mxu0 0
          %490 = vmatprep.subr.bf16.mxu0 0
          %491 = vmatpush1.bf16.msra.mxu0 0
          %492 = vmatprep.subr.bf16.mxu0 0
          %493 = vmatpush1.bf16.msra.mxu0 0
          %494 = vmatprep.subr.bf16.mxu0 0
          %495 = vmatpush1.bf16.msra.mxu0 0
          %496 = vmatprep.subr.bf16.mxu0 0
          %497 = vmatpush1.bf16.msra.mxu0 0
          %498 = vmatprep.subr.bf16.mxu0 0
          %499 = vmatpush1.bf16.msra.mxu0 0
          %500 = vmatprep.mubr.bf16.mxu0 0
          %501 = vmatmul.mubr.bf16.gmra.mrb[0].mxu0 %v466
          %v502 = vpop.f32.mrb[0].mxu0
          %v503 = vadd.f32 %v451, %v502
          %v504 = vpop.f32.mrb[0].mxu0
          %v505 = vpop.f32.mrb[0].mxu0
          %v506 = vadd.f32 %v451, %v505
          %v507 = vpop.f32.mrb[0].mxu0
          %508 = vdwg.mxu0
          %v509 = vld [vmem:[%s6] sm:$0xf]
          %v510 = vld [vmem:[%s6 + $0x4] sm:$0xf]
          %v511 = vld [vmem:[%s7] sm:$0x1]
          %v513 = vlaneseq
          %v514 = vshrl.u32 %v513, 7
          %v515 = vsub.s32 0, %v514
          %v516 = vrot.slane %v511, %v515
          %v520 = vunpack.c.l.b16 %v509
          %v521 = vunpack.c.l.b16 %v510
          %v522 = vpack.c.b16 %v521, %v520
          %524 = vmatprep.subr.bf16.mxu0 0
          %525 = vmatpush1.bf16.msra.mxu0 %v522
          %526 = vmatprep.subr.bf16.mxu0 0
          %527 = vmatpush1.bf16.msra.mxu0 0
          %528 = vmatprep.subr.bf16.mxu0 0
          %529 = vmatpush1.bf16.msra.mxu0 0
          %530 = vmatprep.subr.bf16.mxu0 0
          %531 = vmatpush1.bf16.msra.mxu0 0
          %532 = vmatprep.subr.bf16.mxu0 0
          %533 = vmatpush1.bf16.msra.mxu0 0
          %534 = vmatprep.subr.bf16.mxu0 0
          %535 = vmatpush1.bf16.msra.mxu0 0
          %536 = vmatprep.subr.bf16.mxu0 0
          %537 = vmatpush1.bf16.msra.mxu0 0
          %538 = vmatprep.subr.bf16.mxu0 0
          %539 = vmatpush1.bf16.msra.mxu0 0
          %540 = vmatprep.subr.bf16.mxu0 0
          %541 = vmatpush1.bf16.msra.mxu0 0
          %542 = vmatprep.subr.bf16.mxu0 0
          %543 = vmatpush1.bf16.msra.mxu0 0
          %544 = vmatprep.subr.bf16.mxu0 0
          %545 = vmatpush1.bf16.msra.mxu0 0
          %546 = vmatprep.subr.bf16.mxu0 0
          %547 = vmatpush1.bf16.msra.mxu0 0
          %548 = vmatprep.subr.bf16.mxu0 0
          %549 = vmatpush1.bf16.msra.mxu0 0
          %550 = vmatprep.subr.bf16.mxu0 0
          %551 = vmatpush1.bf16.msra.mxu0 0
          %552 = vmatprep.subr.bf16.mxu0 0
          %553 = vmatpush1.bf16.msra.mxu0 0
          %554 = vmatprep.subr.bf16.mxu0 0
          %555 = vmatpush1.bf16.msra.mxu0 0
          %556 = vmatprep.mubr.bf16.mxu0 0
          %557 = vmatmul.mubr.bf16.gmra.mrb[0].mxu0 %v466
          %v558 = vpop.f32.mrb[0].mxu0
          %v559 = vadd.f32 %v516, %v558
          %v560 = vpop.f32.mrb[0].mxu0
          %v561 = vpop.f32.mrb[0].mxu0
          %v562 = vadd.f32 %v516, %v561
          %v563 = vpop.f32.mrb[0].mxu0
          %564 = vdwg.mxu0
          %v565 = vpack.c.bf16 %v506, %v503
          %v567 = vunpack.c.l.b16 %v565
          %v568 = vunpack.c.h.b16 %v565
          %v569 = vpack.c.b16 %v567, %v567
          %v570 = vpack.c.b16 %v568, %v568
          %vm573 = vcmask 257024
          %574 = vst.msk [vmem:[#allocation2] sm:$0xf] %vm573, %v569
          %vm575 = vcmask 253952
          %576 = vst.msk [vmem:[#allocation2 + $0x4] sm:$0x1] %vm575, %v570
          %v577 = vpack.c.bf16 %v562, %v559
          %v579 = vunpack.c.l.b16 %v577
          %v580 = vunpack.c.h.b16 %v577
          %v581 = vpack.c.b16 %v579, %v579
          %v582 = vpack.c.b16 %v580, %v580
          %585 = vst.msk [vmem:[#allocation3] sm:$0xf] %vm573, %v581
          %586 = vst.msk [vmem:[#allocation3 + $0x4] sm:$0x1] %vm575, %v582
        $region76: #{tpu_custom_call.1} parent=59 // pred_fallthru
          _
        %v587 = vld [vmem:[%s382] sm:$0xf]
        %v588 = vld [vmem:[%s2] sm:$0xf]
        %v589 = vld [vmem:[%s2 + $0x4] sm:$0xf]
        %v590 = vld [vmem:[%s2 + $0x8] sm:$0xf]
        %v591 = vld [vmem:[%s2 + $0xc] sm:$0xf]
        %v592 = vld [vmem:[#allocation7] sm:$0x1]
        %v594 = vlaneseq
        %v595 = vshrl.u32 %v594, 7
        %v596 = vsub.s32 0, %v595
        %v597 = vrot.slane %v592, %v596
        %v603 = vunpack.c.l.b16 %v588
        %v604 = vunpack.c.l.b16 %v589
        %v605 = vunpack.c.l.b16 %v590
        %v606 = vunpack.c.l.b16 %v591
        %v607 = vpack.c.b16 %v604, %v603
        %v608 = vpack.c.b16 %v606, %v605
        %vm611 = vcmask 261120
        %v613 = vsel %vm611, %v587, 0
        %615 = vmatprep.subr.bf16.mxu0 0
        %616 = vmatpush1.bf16.msra.mxu0 %v607
        %617 = vmatprep.subr.bf16.mxu0 0
        %618 = vmatpush1.bf16.msra.mxu0 %v608
        %619 = vmatprep.subr.bf16.mxu0 0
        %620 = vmatpush1.bf16.msra.mxu0 0
        %621 = vmatprep.subr.bf16.mxu0 0
        %622 = vmatpush1.bf16.msra.mxu0 0
        %623 = vmatprep.subr.bf16.mxu0 0
        %624 = vmatpush1.bf16.msra.mxu0 0
        %625 = vmatprep.subr.bf16.mxu0 0
        %626 = vmatpush1.bf16.msra.mxu0 0
        %627 = vmatprep.subr.bf16.mxu0 0
        %628 = vmatpush1.bf16.msra.mxu0 0
        %629 = vmatprep.subr.bf16.mxu0 0
        %630 = vmatpush1.bf16.msra.mxu0 0
        %631 = vmatprep.subr.bf16.mxu0 0
        %632 = vmatpush1.bf16.msra.mxu0 0
        %633 = vmatprep.subr.bf16.mxu0 0
        %634 = vmatpush1.bf16.msra.mxu0 0
        %635 = vmatprep.subr.bf16.mxu0 0
        %636 = vmatpush1.bf16.msra.mxu0 0
        %637 = vmatprep.subr.bf16.mxu0 0
        %638 = vmatpush1.bf16.msra.mxu0 0
        %639 = vmatprep.subr.bf16.mxu0 0
        %640 = vmatpush1.bf16.msra.mxu0 0
        %641 = vmatprep.subr.bf16.mxu0 0
        %642 = vmatpush1.bf16.msra.mxu0 0
        %643 = vmatprep.subr.bf16.mxu0 0
        %644 = vmatpush1.bf16.msra.mxu0 0
        %645 = vmatprep.subr.bf16.mxu0 0
        %646 = vmatpush1.bf16.msra.mxu0 0
        %647 = vmatprep.mubr.bf16.mxu0 0
        %648 = vmatmul.mubr.bf16.gmra.mrb[0].mxu0 %v613
        %v649 = vpop.f32.mrb[0].mxu0
        %v650 = vadd.f32 %v597, %v649
        %v651 = vpop.f32.mrb[0].mxu0
        %v652 = vpop.f32.mrb[0].mxu0
        %v653 = vpop.f32.mrb[0].mxu0
        %654 = vdwg.mxu0
        %v655 = vpack.c.bf16 %v650, %v650
        %v656 = vld [vmem:[#allocation2] sm:$0xf]
        %v657 = vld [vmem:[#allocation2 + $0x4] sm:$0x1]
        %v658 = vld [vmem:[#allocation3] sm:$0xf]
        %v659 = vld [vmem:[#allocation3 + $0x4] sm:$0x1]
        %v662 = vunpack.c.l.b16 %v656
        %v663 = vunpack.c.l.b16 %v657
        %v664 = vpack.c.b16 %v663, %v662
        %vm665 = vcmask 130048
        %v667 = vsel %vm665, %v655, 0
        %v670 = vsel %vm665, %v664, 0
        %672 = vmatprep.subr.bf16.mxu0 0
        %673 = vmatpush1.bf16.xpose.msra.mxu0 %v670
        %674 = vmatprep.subr.bf16.mxu0 0
        %675 = vmatpush1.bf16.xpose.msra.mxu0 0
        %676 = vmatprep.subr.bf16.mxu0 0
        %677 = vmatpush1.bf16.xpose.msra.mxu0 0
        %678 = vmatprep.subr.bf16.mxu0 0
        %679 = vmatpush1.bf16.xpose.msra.mxu0 0
        %680 = vmatprep.subr.bf16.mxu0 0
        %681 = vmatpush1.bf16.xpose.msra.mxu0 0
        %682 = vmatprep.subr.bf16.mxu0 0
        %683 = vmatpush1.bf16.xpose.msra.mxu0 0
        %684 = vmatprep.subr.bf16.mxu0 0
        %685 = vmatpush1.bf16.xpose.msra.mxu0 0
        %686 = vmatprep.subr.bf16.mxu0 0
        %687 = vmatpush1.bf16.xpose.msra.mxu0 0
        %688 = vmatprep.subr.bf16.mxu0 0
        %689 = vmatpush1.bf16.xpose.msra.mxu0 0
        %690 = vmatprep.subr.bf16.mxu0 0
        %691 = vmatpush1.bf16.xpose.msra.mxu0 0
        %692 = vmatprep.subr.bf16.mxu0 0
        %693 = vmatpush1.bf16.xpose.msra.mxu0 0
        %694 = vmatprep.subr.bf16.mxu0 0
        %695 = vmatpush1.bf16.xpose.msra.mxu0 0
        %696 = vmatprep.subr.bf16.mxu0 0
        %697 = vmatpush1.bf16.xpose.msra.mxu0 0
        %698 = vmatprep.subr.bf16.mxu0 0
        %699 = vmatpush1.bf16.xpose.msra.mxu0 0
        %700 = vmatprep.subr.bf16.mxu0 0
        %701 = vmatpush1.bf16.xpose.msra.mxu0 0
        %702 = vmatprep.subr.bf16.mxu0 0
        %703 = vmatpush1.bf16.xpose.msra.mxu0 0
        %704 = vmatprep.mubr.bf16.mxu0 0
        %705 = vmatmul.mubr.bf16.gmra.mrb[0].mxu0 %v667
        %v706 = vpop.f32.mrb[0].mxu0
        %v707 = vadd.f32 0.0, %v706
        %v708 = vpop.f32.mrb[0].mxu0
        %v709 = vpop.f32.mrb[0].mxu0
        %v710 = vpop.f32.mrb[0].mxu0
        %711 = vdwg.mxu0
        %vm712 = vcmask 80896
        %v713 = vsel %vm712, %v707, -inf
        %714 = vmax.xlane.f32.xlu0 %v713
        %v715 = vpop.xlane.xlu0 %714
        %v716 = vsub.f32 %v707, %v715
        %v717 = vmul.f32 %v716, 1.442695
        %v718 = vpow.pop %v717
        %v719 = vsel %vm712, %v718, 0.0
        %720 = vadd.xlane.f32.xlu0 %v719
        %v721 = vpop.xlane.xlu0 %720
        %v722 = vrcp.pop %v721
        %v723 = vmul.f32 %v718, %v722
        %v724 = vpack.c.bf16 %v723, %v723
        %v727 = vunpack.c.l.b16 %v658
        %v728 = vunpack.c.l.b16 %v659
        %v729 = vpack.c.b16 %v728, %v727
        %v731 = vsel %vm712, %v724, 0
        %vm733 = vcmask 1044480
        %v735 = vsel %vm733, %v729, 0
        %737 = vmatprep.subr.bf16.mxu0 0
        %738 = vmatpush1.bf16.msra.mxu0 %v735
        %739 = vmatprep.subr.bf16.mxu0 0
        %740 = vmatpush1.bf16.msra.mxu0 0
        %741 = vmatprep.subr.bf16.mxu0 0
        %742 = vmatpush1.bf16.msra.mxu0 0
        %743 = vmatprep.subr.bf16.mxu0 0
        %744 = vmatpush1.bf16.msra.mxu0 0
        %745 = vmatprep.subr.bf16.mxu0 0
        %746 = vmatpush1.bf16.msra.mxu0 0
        %747 = vmatprep.subr.bf16.mxu0 0
        %748 = vmatpush1.bf16.msra.mxu0 0
        %749 = vmatprep.subr.bf16.mxu0 0
        %750 = vmatpush1.bf16.msra.mxu0 0
        %751 = vmatprep.subr.bf16.mxu0 0
        %752 = vmatpush1.bf16.msra.mxu0 0
        %753 = vmatprep.subr.bf16.mxu0 0
        %754 = vmatpush1.bf16.msra.mxu0 0
        %755 = vmatprep.subr.bf16.mxu0 0
        %756 = vmatpush1.bf16.msra.mxu0 0
        %757 = vmatprep.subr.bf16.mxu0 0
        %758 = vmatpush1.bf16.msra.mxu0 0
        %759 = vmatprep.subr.bf16.mxu0 0
        %760 = vmatpush1.bf16.msra.mxu0 0
        %761 = vmatprep.subr.bf16.mxu0 0
        %762 = vmatpush1.bf16.msra.mxu0 0
        %763 = vmatprep.subr.bf16.mxu0 0
        %764 = vmatpush1.bf16.msra.mxu0 0
        %765 = vmatprep.subr.bf16.mxu0 0
        %766 = vmatpush1.bf16.msra.mxu0 0
        %767 = vmatprep.subr.bf16.mxu0 0
        %768 = vmatpush1.bf16.msra.mxu0 0
        %769 = vmatprep.mubr.bf16.mxu0 0
        %770 = vmatmul.mubr.bf16.gmra.mrb[0].mxu0 %v731
        %v771 = vpop.f32.mrb[0].mxu0
        %v772 = vadd.f32 0.0, %v771
        %v773 = vpop.f32.mrb[0].mxu0
        %v774 = vpop.f32.mrb[0].mxu0
        %v775 = vpop.f32.mrb[0].mxu0
        %776 = vdwg.mxu0
        %v777 = vpack.c.bf16 %v772, %v772
        %v778 = vld [vmem:[%s8] sm:$0xf]
        %v779 = vld [vmem:[%s8 + $0x4] sm:$0xf]
        %781 = vrot.lane.b32.xlu0 %v655, 112
        %v782 = vpop.permute.xlu0 %781
        %783 = vrot.lane.b32.xlu0 %v664, 112
        %v784 = vpop.permute.xlu0 %783
        %v786 = vsel %vm665, %v782, 0
        %v789 = vsel %vm665, %v784, 0
        %791 = vmatprep.subr.bf16.mxu0 0
        %792 = vmatpush1.bf16.xpose.msra.mxu0 %v789
        %793 = vmatprep.subr.bf16.mxu0 0
        %794 = vmatpush1.bf16.xpose.msra.mxu0 0
        %795 = vmatprep.subr.bf16.mxu0 0
        %796 = vmatpush1.bf16.xpose.msra.mxu0 0
        %797 = vmatprep.subr.bf16.mxu0 0
        %798 = vmatpush1.bf16.xpose.msra.mxu0 0
        %799 = vmatprep.subr.bf16.mxu0 0
        %800 = vmatpush1.bf16.xpose.msra.mxu0 0
        %801 = vmatprep.subr.bf16.mxu0 0
        %802 = vmatpush1.bf16.xpose.msra.mxu0 0
        %803 = vmatprep.subr.bf16.mxu0 0
        %804 = vmatpush1.bf16.xpose.msra.mxu0 0
        %805 = vmatprep.subr.bf16.mxu0 0
        %806 = vmatpush1.bf16.xpose.msra.mxu0 0
        %807 = vmatprep.subr.bf16.mxu0 0
        %808 = vmatpush1.bf16.xpose.msra.mxu0 0
        %809 = vmatprep.subr.bf16.mxu0 0
        %810 = vmatpush1.bf16.xpose.msra.mxu0 0
        %811 = vmatprep.subr.bf16.mxu0 0
        %812 = vmatpush1.bf16.xpose.msra.mxu0 0
        %813 = vmatprep.subr.bf16.mxu0 0
        %814 = vmatpush1.bf16.xpose.msra.mxu0 0
        %815 = vmatprep.subr.bf16.mxu0 0
        %816 = vmatpush1.bf16.xpose.msra.mxu0 0
        %817 = vmatprep.subr.bf16.mxu0 0
        %818 = vmatpush1.bf16.xpose.msra.mxu0 0
        %819 = vmatprep.subr.bf16.mxu0 0
        %820 = vmatpush1.bf16.xpose.msra.mxu0 0
        %821 = vmatprep.subr.bf16.mxu0 0
        %822 = vmatpush1.bf16.xpose.msra.mxu0 0
        %823 = vmatprep.mubr.bf16.mxu0 0
        %824 = vmatmul.mubr.bf16.gmra.mrb[0].mxu0 %v786
        %v825 = vpop.f32.mrb[0].mxu0
        %v826 = vadd.f32 0.0, %v825
        %v827 = vpop.f32.mrb[0].mxu0
        %v828 = vpop.f32.mrb[0].mxu0
        %v829 = vpop.f32.mrb[0].mxu0
        %830 = vdwg.mxu0
        %v831 = vsel %vm712, %v826, -inf
        %832 = vmax.xlane.f32.xlu0 %v831
        %v833 = vpop.xlane.xlu0 %832
        %v834 = vsub.f32 %v826, %v833
        %v835 = vmul.f32 %v834, 1.442695
        %v836 = vpow.pop %v835
        %v837 = vsel %vm712, %v836, 0.0
        %838 = vadd.xlane.f32.xlu0 %v837
        %v839 = vpop.xlane.xlu0 %838
        %v840 = vrcp.pop %v839
        %v841 = vmul.f32 %v836, %v840
        %v842 = vpack.c.bf16 %v841, %v841
        %843 = vrot.lane.b32.xlu0 %v729, 112
        %v844 = vpop.permute.xlu0 %843
        %v846 = vsel %vm712, %v842, 0
        %v849 = vsel %vm733, %v844, 0
        %851 = vmatprep.subr.bf16.mxu0 0
        %852 = vmatpush1.bf16.msra.mxu0 %v849
        %853 = vmatprep.subr.bf16.mxu0 0
        %854 = vmatpush1.bf16.msra.mxu0 0
        %855 = vmatprep.subr.bf16.mxu0 0
        %856 = vmatpush1.bf16.msra.mxu0 0
        %857 = vmatprep.subr.bf16.mxu0 0
        %858 = vmatpush1.bf16.msra.mxu0 0
        %859 = vmatprep.subr.bf16.mxu0 0
        %860 = vmatpush1.bf16.msra.mxu0 0
        %861 = vmatprep.subr.bf16.mxu0 0
        %862 = vmatpush1.bf16.msra.mxu0 0
        %863 = vmatprep.subr.bf16.mxu0 0
        %864 = vmatpush1.bf16.msra.mxu0 0
        %865 = vmatprep.subr.bf16.mxu0 0
        %866 = vmatpush1.bf16.msra.mxu0 0
        %867 = vmatprep.subr.bf16.mxu0 0
        %868 = vmatpush1.bf16.msra.mxu0 0
        %869 = vmatprep.subr.bf16.mxu0 0
        %870 = vmatpush1.bf16.msra.mxu0 0
        %871 = vmatprep.subr.bf16.mxu0 0
        %872 = vmatpush1.bf16.msra.mxu0 0
        %873 = vmatprep.subr.bf16.mxu0 0
        %874 = vmatpush1.bf16.msra.mxu0 0
        %875 = vmatprep.subr.bf16.mxu0 0
        %876 = vmatpush1.bf16.msra.mxu0 0
        %877 = vmatprep.subr.bf16.mxu0 0
        %878 = vmatpush1.bf16.msra.mxu0 0
        %879 = vmatprep.subr.bf16.mxu0 0
        %880 = vmatpush1.bf16.msra.mxu0 0
        %881 = vmatprep.subr.bf16.mxu0 0
        %882 = vmatpush1.bf16.msra.mxu0 0
        %883 = vmatprep.mubr.bf16.mxu0 0
        %884 = vmatmul.mubr.bf16.gmra.mrb[0].mxu0 %v846
        %v885 = vpop.f32.mrb[0].mxu0
        %v886 = vadd.f32 0.0, %v885
        %v887 = vpop.f32.mrb[0].mxu0
        %v888 = vpop.f32.mrb[0].mxu0
        %v889 = vpop.f32.mrb[0].mxu0
        %890 = vdwg.mxu0
        %v891 = vpack.c.bf16 %v886, %v886
        %v892 = vld [vmem:[%s8 + $0x8] sm:$0xf]
        %v893 = vld [vmem:[%s8 + $0xc] sm:$0xf]
        %v896 = vunpack.c.l.b16 %v892
        %v897 = vunpack.c.l.b16 %v893
        %v898 = vpack.c.b16 %v897, %v896
        %v901 = vsel %vm665, %v891, 0
        %903 = vmatprep.subr.bf16.mxu0 0
        %904 = vmatpush1.bf16.msra.mxu0 %v898
        %905 = vmatprep.subr.bf16.mxu0 0
        %906 = vmatpush1.bf16.msra.mxu0 0
        %907 = vmatprep.subr.bf16.mxu0 0
        %908 = vmatpush1.bf16.msra.mxu0 0
        %909 = vmatprep.subr.bf16.mxu0 0
        %910 = vmatpush1.bf16.msra.mxu0 0
        %911 = vmatprep.subr.bf16.mxu0 0
        %912 = vmatpush1.bf16.msra.mxu0 0
        %913 = vmatprep.subr.bf16.mxu0 0
        %914 = vmatpush1.bf16.msra.mxu0 0
        %915 = vmatprep.subr.bf16.mxu0 0
        %916 = vmatpush1.bf16.msra.mxu0 0
        %917 = vmatprep.subr.bf16.mxu0 0
        %918 = vmatpush1.bf16.msra.mxu0 0
        %919 = vmatprep.subr.bf16.mxu0 0
        %920 = vmatpush1.bf16.msra.mxu0 0
        %921 = vmatprep.subr.bf16.mxu0 0
        %922 = vmatpush1.bf16.msra.mxu0 0
        %923 = vmatprep.subr.bf16.mxu0 0
        %924 = vmatpush1.bf16.msra.mxu0 0
        %925 = vmatprep.subr.bf16.mxu0 0
        %926 = vmatpush1.bf16.msra.mxu0 0
        %927 = vmatprep.subr.bf16.mxu0 0
        %928 = vmatpush1.bf16.msra.mxu0 0
        %929 = vmatprep.subr.bf16.mxu0 0
        %930 = vmatpush1.bf16.msra.mxu0 0
        %931 = vmatprep.subr.bf16.mxu0 0
        %932 = vmatpush1.bf16.msra.mxu0 0
        %933 = vmatprep.subr.bf16.mxu0 0
        %934 = vmatpush1.bf16.msra.mxu0 0
        %935 = vmatprep.mubr.bf16.mxu0 0
        %936 = vmatmul.mubr.bf16.gmra.mrb[0].mxu0 %v901
        %v937 = vpop.f32.mrb[0].mxu0
        %v938 = vadd.f32 0.0, %v937
        %v939 = vpop.f32.mrb[0].mxu0
        %v940 = vpop.f32.mrb[0].mxu0
        %v941 = vpop.f32.mrb[0].mxu0
        %942 = vdwg.mxu0
        %v945 = vunpack.c.l.b16 %v778
        %v946 = vunpack.c.l.b16 %v779
        %v947 = vpack.c.b16 %v946, %v945
        %v950 = vsel %vm665, %v777, 0
        %952 = vmatprep.subr.bf16.mxu0 0
        %953 = vmatpush1.bf16.msra.mxu0 %v947
        %954 = vmatprep.subr.bf16.mxu0 0
        %955 = vmatpush1.bf16.msra.mxu0 0
        %956 = vmatprep.subr.bf16.mxu0 0
        %957 = vmatpush1.bf16.msra.mxu0 0
        %958 = vmatprep.subr.bf16.mxu0 0
        %959 = vmatpush1.bf16.msra.mxu0 0
        %960 = vmatprep.subr.bf16.mxu0 0
        %961 = vmatpush1.bf16.msra.mxu0 0
        %962 = vmatprep.subr.bf16.mxu0 0
        %963 = vmatpush1.bf16.msra.mxu0 0
        %964 = vmatprep.subr.bf16.mxu0 0
        %965 = vmatpush1.bf16.msra.mxu0 0
        %966 = vmatprep.subr.bf16.mxu0 0
        %967 = vmatpush1.bf16.msra.mxu0 0
        %968 = vmatprep.subr.bf16.mxu0 0
        %969 = vmatpush1.bf16.msra.mxu0 0
        %970 = vmatprep.subr.bf16.mxu0 0
        %971 = vmatpush1.bf16.msra.mxu0 0
        %972 = vmatprep.subr.bf16.mxu0 0
        %973 = vmatpush1.bf16.msra.mxu0 0
        %974 = vmatprep.subr.bf16.mxu0 0
        %975 = vmatpush1.bf16.msra.mxu0 0
        %976 = vmatprep.subr.bf16.mxu0 0
        %977 = vmatpush1.bf16.msra.mxu0 0
        %978 = vmatprep.subr.bf16.mxu0 0
        %979 = vmatpush1.bf16.msra.mxu0 0
        %980 = vmatprep.subr.bf16.mxu0 0
        %981 = vmatpush1.bf16.msra.mxu0 0
        %982 = vmatprep.subr.bf16.mxu0 0
        %983 = vmatpush1.bf16.msra.mxu0 0
        %984 = vmatprep.mubr.bf16.mxu0 0
        %985 = vmatmul.mubr.bf16.gmra.mrb[0].mxu0 %v950
        %v986 = vpop.f32.mrb[0].mxu0
        %v987 = vadd.f32 %v938, %v986
        %v988 = vpop.f32.mrb[0].mxu0
        %v989 = vpop.f32.mrb[0].mxu0
        %v990 = vpop.f32.mrb[0].mxu0
        %991 = vdwg.mxu0
        %v992 = vld [vmem:[%s9] sm:$0x1]
        %v994 = vlaneseq
        %v995 = vshrl.u32 %v994, 7
        %v996 = vsub.s32 0, %v995
        %v997 = vrot.slane %v992, %v996
        %v999 = vadd.f32 %v987, %v997
        %1000 = vst.msk [vmem:[%s431] sm:$0xff] %vm611, %v999
        %s1001 = sand.u32 %s272, 1
        %s1002 = scalar_lea.sflag [#allocation6], %s1001
        %s1003 = sand.u32 %s272, 1
        %s1004 = smul.addr %s1003, 8
        %s1005 = scalar_lea.vmem [#allocation10], %s1004
        // Predicated region
        $region77: #{tpu_custom_call.1} parent=59 // pred_check
          %p1006 = pneg %p282
        $region78: #{tpu_custom_call.1} parent=59 // pred_check_branch
          %1008 = sbr.rel (%p1006) target = $region80
        $region79: #{tpu_custom_call.1} parent=59 // pred_region
          %s1010 = ssub.s32 128, 128
          %1011 = vsyncadd %s1002, %s1010
          %s1012 = sadd.s32 %s33, %s32
          %s1013 = smul.addr %s1012, 128
          %s1014 = scalar_lea.hbm %s10, %s1013
          %s1016 = sshll.u32 %s1005, 4
          %s1017 = int_to_ptr.vmem [resolvable:$true] %s1016
          %1019 = dma.vmem_to_hbm [thread:$0]  %s1017, 128, %s1014, %s1002
        $region80: #{tpu_custom_call.1} parent=59 // pred_fallthru
          _
      $region60: #{tpu_custom_call.1} parent=5 // pred_fallthru
        _
      %p1020 = scmp.le.s32.totalorder 2, %s23
      // Predicated region
      $region81: #{tpu_custom_call.1} parent=5 // pred_check
        %p1021 = pneg %p1020
      $region82: #{tpu_custom_call.1} parent=5 // pred_check_branch
        %1023 = sbr.rel (%p1021) target = $region84
      $region83: #{tpu_custom_call.1} parent=5 // pred_region
        %s1024 = ssub.s32 %s23, 2
        // Predicated region
        $region85: #{tpu_custom_call.1} parent=83 // pred_check
          %p1025 = pneg %p288
        $region86: #{tpu_custom_call.1} parent=83 // pred_check_branch
          %1027 = sbr.rel (%p1025) target = $region88
        $region87: #{tpu_custom_call.1} parent=83 // pred_region
          %s1028 = sand.u32 %s273, 1
          %s1029 = scalar_lea.sflag [#allocation6], %s1028
          %s1030 = sand.u32 %s273, 1
          %s1031 = smul.addr %s1030, 8
          %s1032 = scalar_lea.vmem [#allocation10], %s1031
          %1033 = dma.done %s1029, 128
        $region88: #{tpu_custom_call.1} parent=83 // pred_fallthru
          _
      $region84: #{tpu_custom_call.1} parent=5 // pred_fallthru
        _
    $region6: #{tpu_custom_call.1} parent=1 // loop_footer
      %s27 = sadd.s32 1, %s23
    $region7: #{tpu_custom_call.1} parent=1 // loop_footer_branch
      %22 = sbr.rel target = $region3
    $region8: #{tpu_custom_call.1} parent=1 // loop_exit
      _
    %1034 = vsyncpa [#allocation5], 1
    %s1035 = scalar_lea.sflag [#allocation5], 1
    %1036 = vsyncpa %s1035, 1
    %1037 = vsyncpa [#allocation8], 1
    %1038 = vsyncpa [#allocation6], 1
    %s1039 = scalar_lea.sflag [#allocation6], 1
    %1040 = vsyncpa %s1039, 1

// kernel: tpu_custom_call.1
$region0: #{tpu_custom_call.1}
  #allocation0 [shape = 'u32[]', space=smem, size = 0x4, offset = 0x4, fixed_abs, tag = 'smem constant byte address 0x4 - core index']
  #allocation1 [shape = 'u32[144,128]{1,0:T(1,128)}', space=vmem, size = 0x12000, scoped, tag = 'internal scratch']
  #allocation2 [shape = 'bf16[10,32]{1,0:T(8,128)(2,1)}', space=vmem, size = 0x1000, scoped, tag = 'scratch operand']
  #allocation3 [shape = 'bf16[10,32]{1,0:T(8,128)(2,1)}', space=vmem, size = 0x1000, scoped, tag = 'scratch operand']
  %s0 = inlined_call_operand.hbm [shape: bf16[2,8,32], index: 0, kind: input, shape index: {}]
  %s1 = inlined_call_operand.vmem [shape: bf16[2,10,16], index: 1, kind: input, shape index: {}]
  %s2 = inlined_call_operand.vmem [shape: bf16[32,32], index: 2, kind: input, shape index: {}]
  %s3 = inlined_call_operand.hbm [shape: f32[1,32], index: 3, kind: input, shape index: {}]
  %s4 = inlined_call_operand.vmem [shape: bf16[16,32], index: 4, kind: input, shape index: {}]
  %s5 = inlined_call_operand.hbm [shape: f32[1,32], index: 5, kind: input, shape index: {}]
  %s6 = inlined_call_operand.vmem [shape: bf16[16,32], index: 6, kind: input, shape index: {}]
  %s7 = inlined_call_operand.vmem [shape: f32[1,32], index: 7, kind: input, shape index: {}]
  %s8 = inlined_call_operand.vmem [shape: bf16[32,32], index: 8, kind: input, shape index: {}]
  %s9 = inlined_call_operand.vmem [shape: f32[1,32], index: 9, kind: input, shape index: {}]
  %s10 = inlined_call_operand.hbm [shape: f32[2,8,32], index: 10, kind: output, shape index: {}]
  %s11 = sld [smem:[#allocation0]]
  $region89: #{tpu_custom_call.1} parent=0
    _
  %s13 = ssub.s32 1, %s11
  %s14 = scalar_select 0, %s13, %s11
  $region1: #{tpu_custom_call.1} parent=0
    #allocation4 [shape = 'u8[4096]{0}', space=vmem, size = 0x1000, scoped, tag = 'input window, operand 0']
    #allocation5 [shape = 's32[2]{0}', space=sflag, size = 0x8, scoped, tag = 'scoped memory for tpu_custom_call.1']
    #allocation6 [shape = 's32[2]{0}', space=sflag, size = 0x8, scoped, tag = 'scoped memory for tpu_custom_call.1']
    #allocation7 [shape = 'u8[512]{0}', space=vmem, size = 0x400, scoped, tag = 'input window, operand 3, single buffered']
    #allocation8 [shape = 's32[1]{0}', space=sflag, size = 0x4, scoped, tag = 'scoped memory for tpu_custom_call.1']
    #allocation9 [shape = 'u8[512]{0}', space=vmem, size = 0x400, scoped, tag = 'input window, operand 5, single buffered']
    #allocation10 [shape = 'u8[8192]{0}', space=vmem, size = 0x2000, scoped, tag = 'output window, operand 0']
    %15 = vsyncpa [#allocation5], 0
    %s16 = scalar_lea.sflag [#allocation5], 1
    %17 = vsyncpa %s16, 0
    %18 = vsyncpa [#allocation8], 0
    %19 = vsyncpa [#allocation6], 0
    %s20 = scalar_lea.sflag [#allocation6], 1
    %21 = vsyncpa %s20, 0
    loop: start=0, step=1, limit=4
    $region2: #{tpu_custom_call.1} parent=1 // loop_pre_header
      _
    $region3: #{tpu_custom_call.1} parent=1 // loop_header
      %s23 = sphi 0, %s27
      %p24 = scmp.ge.s32.totalorder %s23, 4
      %s30 = sphi 0, %s42
      %s31 = sphi 0, %s38
      %s32 = sphi 0, %s30
      %s33 = sphi 0, %s31
      %s34 = sphi 0, %s32
      %s35 = sphi 0, %s33
      %s47 = sphi 0, %s49
      %s50 = sphi 0, %s47
      %s51 = sphi 0, %s50
      %s67 = sphi 0, %s51
      %s73 = sphi 0, %s75
      %s76 = sphi 0, %s73
      %s77 = sphi 0, %s76
      %s93 = sphi 0, %s77
      %s97 = sphi 0, %s97
      %s99 = sphi 0, %s97
      %s100 = sphi 0, %s99
      %s114 = sphi 0, %s100
      %s118 = sphi 0, %s118
      %s120 = sphi 0, %s118
      %s121 = sphi 0, %s120
      %s135 = sphi 0, %s121
      %s139 = sphi 0, %s139
      %s141 = sphi 0, %s139
      %s142 = sphi 0, %s141
      %s156 = sphi 0, %s142
      %s160 = sphi 0, %s160
      %s162 = sphi 0, %s160
      %s163 = sphi 0, %s162
      %s177 = sphi 0, %s163
      %s181 = sphi 0, %s181
      %s183 = sphi 0, %s181
      %s184 = sphi 0, %s183
      %s198 = sphi 0, %s184
      %s202 = sphi 0, %s202
      %s204 = sphi 0, %s202
      %s205 = sphi 0, %s204
      %s219 = sphi 0, %s205
      %s223 = sphi 0, %s223
      %s225 = sphi 0, %s223
      %s226 = sphi 0, %s225
      %s240 = sphi 0, %s226
      %s244 = sphi 0, %s244
      %s246 = sphi 0, %s244
      %s247 = sphi 0, %s246
      %s261 = sphi 0, %s247
      %s269 = sphi 0, %s271
      %s272 = sphi 0, %s269
      %s273 = sphi 0, %s272
      %s289 = sphi 0, %s273
    $region4: #{tpu_custom_call.1} parent=1 // loop_header_branch
      %26 = sbr.rel (%p24) target = $region8
    $region5: #{tpu_custom_call.1} parent=1 // loop_body
      %s28 = ssub.s32 %s23, 1
      %s29 = ssub.s32 %s23, 2
      %s36 = sadd.s32 1, %s31
      %p37 = scmp.ge.s32.totalorder %s36, 1
      %s38 = scalar_select %p37, 0, %s36
      %s39 = sadd.s32 1, %s30
      %s40 = scalar_select %p37, %s39, %s30
      %p41 = scmp.ge.s32.totalorder %s40, 2
      %s42 = scalar_select %p41, 0, %s40
      %s43 = ssub.s32 %s30, %s42
      %s44 = ssub.s32 %s31, %s38
      %s45 = sor.u32 %s43, %s44
      %p46 = scmp.eq.s32.totalorder %s45, 0
      %s48 = sadd.s32 %s47, 1
      %s49 = scalar_select %p46, %s47, %s48
      %p52 = pneg %p46
      %p53 = scmp.eq.s32.totalorder %s23, 1
      %p54 = por %p52, %p53
      %p55 = scmp.ne.s32.totalorder %s47, %s50
      %p56 = scmp.eq.s32.totalorder %s23, 0
      %p57 = por %p55, %p56
      %p58 = scmp.ne.s32.totalorder %s47, %s50
      %p59 = scmp.eq.s32.totalorder %s28, 1
      %p60 = por %p58, %p59
      %p61 = scmp.ne.s32.totalorder %s50, %s51
      %p62 = scmp.eq.s32.totalorder %s28, 0
      %p63 = por %p61, %p62
      %p64 = scmp.ne.s32.totalorder %s50, %s51
      %p65 = scmp.eq.s32.totalorder %s29, 1
      %p66 = por %p64, %p65
      %p68 = scmp.ne.s32.totalorder %s51, %s67
      %p69 = scmp.eq.s32.totalorder %s29, 0
      %p70 = por %p68, %p69
      %s71 = ssub.s32 %s30, %s42
      %p72 = scmp.eq.s32.totalorder %s71, 0
      %s74 = sadd.s32 %s73, 1
      %s75 = scalar_select %p72, %s73, %s74
      %p78 = pneg %p72
      %p79 = scmp.eq.s32.totalorder %s23, 1
      %p80 = por %p78, %p79
      %p81 = scmp.ne.s32.totalorder %s73, %s76
      %p82 = scmp.eq.s32.totalorder %s23, 0
      %p83 = por %p81, %p82
      %p84 = scmp.ne.s32.totalorder %s73, %s76
      %p85 = scmp.eq.s32.totalorder %s28, 1
      %p86 = por %p84, %p85
      %p87 = scmp.ne.s32.totalorder %s76, %s77
      %p88 = scmp.eq.s32.totalorder %s28, 0
      %p89 = por %p87, %p88
      %p90 = scmp.ne.s32.totalorder %s76, %s77
      %p91 = scmp.eq.s32.totalorder %s29, 1
      %p92 = por %p90, %p91
      %p94 = scmp.ne.s32.totalorder %s77, %s93
      %p95 = scmp.eq.s32.totalorder %s29, 0
      %p96 = por %p94, %p95
      %s98 = sadd.s32 %s97, 1
      %p101 = scmp.eq.s32.totalorder %s23, 1
      %p102 = scmp.ne.s32.totalorder %s97, %s99
      %p103 = scmp.eq.s32.totalorder %s23, 0
      %p104 = por %p102, %p103
      %p105 = scmp.ne.s32.totalorder %s97, %s99
      %p106 = scmp.eq.s32.totalorder %s28, 1
      %p107 = por %p105, %p106
      %p108 = scmp.ne.s32.totalorder %s99, %s100
      %p109 = scmp.eq.s32.totalorder %s28, 0
      %p110 = por %p108, %p109
      %p111 = scmp.ne.s32.totalorder %s99, %s100
      %p112 = scmp.eq.s32.totalorder %s29, 1
      %p113 = por %p111, %p112
      %p115 = scmp.ne.s32.totalorder %s100, %s114
      %p116 = scmp.eq.s32.totalorder %s29, 0
      %p117 = por %p115, %p116
      %s119 = sadd.s32 %s118, 1
      %p122 = scmp.eq.s32.totalorder %s23, 1
      %p123 = scmp.ne.s32.totalorder %s118, %s120
      %p124 = scmp.eq.s32.totalorder %s23, 0
      %p125 = por %p123, %p124
      %p126 = scmp.ne.s32.totalorder %s118, %s120
      %p127 = scmp.eq.s32.totalorder %s28, 1
      %p128 = por %p126, %p127
      %p129 = scmp.ne.s32.totalorder %s120, %s121
      %p130 = scmp.eq.s32.totalorder %s28, 0
      %p131 = por %p129, %p130
      %p132 = scmp.ne.s32.totalorder %s120, %s121
      %p133 = scmp.eq.s32.totalorder %s29, 1
      %p134 = por %p132, %p133
      %p136 = scmp.ne.s32.totalorder %s121, %s135
      %p137 = scmp.eq.s32.totalorder %s29, 0
      %p138 = por %p136, %p137
      %s140 = sadd.s32 %s139, 1
      %p143 = scmp.eq.s32.totalorder %s23, 1
      %p144 = scmp.ne.s32.totalorder %s139, %s141
      %p145 = scmp.eq.s32.totalorder %s23, 0
      %p146 = por %p144, %p145
      %p147 = scmp.ne.s32.totalorder %s139, %s141
      %p148 = scmp.eq.s32.totalorder %s28, 1
      %p149 = por %p147, %p148
      %p150 = scmp.ne.s32.totalorder %s141, %s142
      %p151 = scmp.eq.s32.totalorder %s28, 0
      %p152 = por %p150, %p151
      %p153 = scmp.ne.s32.totalorder %s141, %s142
      %p154 = scmp.eq.s32.totalorder %s29, 1
      %p155 = por %p153, %p154
      %p157 = scmp.ne.s32.totalorder %s142, %s156
      %p158 = scmp.eq.s32.totalorder %s29, 0
      %p159 = por %p157, %p158
      %s161 = sadd.s32 %s160, 1
      %p164 = scmp.eq.s32.totalorder %s23, 1
      %p165 = scmp.ne.s32.totalorder %s160, %s162
      %p166 = scmp.eq.s32.totalorder %s23, 0
      %p167 = por %p165, %p166
      %p168 = scmp.ne.s32.totalorder %s160, %s162
      %p169 = scmp.eq.s32.totalorder %s28, 1
      %p170 = por %p168, %p169
      %p171 = scmp.ne.s32.totalorder %s162, %s163
      %p172 = scmp.eq.s32.totalorder %s28, 0
      %p173 = por %p171, %p172
      %p174 = scmp.ne.s32.totalorder %s162, %s163
      %p175 = scmp.eq.s32.totalorder %s29, 1
      %p176 = por %p174, %p175
      %p178 = scmp.ne.s32.totalorder %s163, %s177
      %p179 = scmp.eq.s32.totalorder %s29, 0
      %p180 = por %p178, %p179
      %s182 = sadd.s32 %s181, 1
      %p185 = scmp.eq.s32.totalorder %s23, 1
      %p186 = scmp.ne.s32.totalorder %s181, %s183
      %p187 = scmp.eq.s32.totalorder %s23, 0
      %p188 = por %p186, %p187
      %p189 = scmp.ne.s32.totalorder %s181, %s183
      %p190 = scmp.eq.s32.totalorder %s28, 1
      %p191 = por %p189, %p190
      %p192 = scmp.ne.s32.totalorder %s183, %s184
      %p193 = scmp.eq.s32.totalorder %s28, 0
      %p194 = por %p192, %p193
      %p195 = scmp.ne.s32.totalorder %s183, %s184
      %p196 = scmp.eq.s32.totalorder %s29, 1
      %p197 = por %p195, %p196
      %p199 = scmp.ne.s32.totalorder %s184, %s198
      %p200 = scmp.eq.s32.totalorder %s29, 0
      %p201 = por %p199, %p200
      %s203 = sadd.s32 %s202, 1
      %p206 = scmp.eq.s32.totalorder %s23, 1
      %p207 = scmp.ne.s32.totalorder %s202, %s204
      %p208 = scmp.eq.s32.totalorder %s23, 0
      %p209 = por %p207, %p208
      %p210 = scmp.ne.s32.totalorder %s202, %s204
      %p211 = scmp.eq.s32.totalorder %s28, 1
      %p212 = por %p210, %p211
      %p213 = scmp.ne.s32.totalorder %s204, %s205
      %p214 = scmp.eq.s32.totalorder %s28, 0
      %p215 = por %p213, %p214
      %p216 = scmp.ne.s32.totalorder %s204, %s205
      %p217 = scmp.eq.s32.totalorder %s29, 1
      %p218 = por %p216, %p217
      %p220 = scmp.ne.s32.totalorder %s205, %s219
      %p221 = scmp.eq.s32.totalorder %s29, 0
      %p222 = por %p220, %p221
      %s224 = sadd.s32 %s223, 1
      %p227 = scmp.eq.s32.totalorder %s23, 1
      %p228 = scmp.ne.s32.totalorder %s223, %s225
      %p229 = scmp.eq.s32.totalorder %s23, 0
      %p230 = por %p228, %p229
      %p231 = scmp.ne.s32.totalorder %s223, %s225
      %p232 = scmp.eq.s32.totalorder %s28, 1
      %p233 = por %p231, %p232
      %p234 = scmp.ne.s32.totalorder %s225, %s226
      %p235 = scmp.eq.s32.totalorder %s28, 0
      %p236 = por %p234, %p235
      %p237 = scmp.ne.s32.totalorder %s225, %s226
      %p238 = scmp.eq.s32.totalorder %s29, 1
      %p239 = por %p237, %p238
      %p241 = scmp.ne.s32.totalorder %s226, %s240
      %p242 = scmp.eq.s32.totalorder %s29, 0
      %p243 = por %p241, %p242
      %s245 = sadd.s32 %s244, 1
      %p248 = scmp.eq.s32.totalorder %s23, 1
      %p249 = scmp.ne.s32.totalorder %s244, %s246
      %p250 = scmp.eq.s32.totalorder %s23, 0
      %p251 = por %p249, %p250
      %p252 = scmp.ne.s32.totalorder %s244, %s246
      %p253 = scmp.eq.s32.totalorder %s28, 1
      %p254 = por %p252, %p253
      %p255 = scmp.ne.s32.totalorder %s246, %s247
      %p256 = scmp.eq.s32.totalorder %s28, 0
      %p257 = por %p255, %p256
      %p258 = scmp.ne.s32.totalorder %s246, %s247
      %p259 = scmp.eq.s32.totalorder %s29, 1
      %p260 = por %p258, %p259
      %p262 = scmp.ne.s32.totalorder %s247, %s261
      %p263 = scmp.eq.s32.totalorder %s29, 0
      %p264 = por %p262, %p263
      %s265 = ssub.s32 %s30, %s42
      %s266 = ssub.s32 %s31, %s38
      %s267 = sor.u32 %s265, %s266
      %p268 = scmp.eq.s32.totalorder %s267, 0
      %s270 = sadd.s32 %s269, 1
      %s271 = scalar_select %p268, %s269, %s270
      %p274 = pneg %p268
      %p275 = scmp.eq.s32.totalorder %s23, 1
      %p276 = por %p274, %p275
      %p277 = scmp.ne.s32.totalorder %s269, %s272
      %p278 = scmp.eq.s32.totalorder %s23, 0
      %p279 = por %p277, %p278
      %p280 = scmp.ne.s32.totalorder %s269, %s272
      %p281 = scmp.eq.s32.totalorder %s28, 1
      %p282 = por %p280, %p281
      %p283 = scmp.ne.s32.totalorder %s272, %s273
      %p284 = scmp.eq.s32.totalorder %s28, 0
      %p285 = por %p283, %p284
      %p286 = scmp.ne.s32.totalorder %s272, %s273
      %p287 = scmp.eq.s32.totalorder %s29, 1
      %p288 = por %p286, %p287
      %p290 = scmp.ne.s32.totalorder %s273, %s289
      %p291 = scmp.eq.s32.totalorder %s29, 0
      %p292 = por %p290, %p291
      %p293 = scmp.le.s32.totalorder 1, %s23
      %p294 = scmp.lt.s32.totalorder %s23, 3
      %p295 = pnand %p293, %p294
      %p296 = pneg %p295
      // Predicated region
      $region9: #{tpu_custom_call.1} parent=5 // pred_check
        _
      $region10: #{tpu_custom_call.1} parent=5 // pred_check_branch
        %298 = sbr.rel (%p295) target = $region12
      $region11: #{tpu_custom_call.1} parent=5 // pred_region
        %s299 = ssub.s32 %s23, 1
        // Predicated region
        $region13: #{tpu_custom_call.1} parent=11 // pred_check
          %p300 = pneg %p110
        $region14: #{tpu_custom_call.1} parent=11 // pred_check_branch
          %302 = sbr.rel (%p300) target = $region16
        $region15: #{tpu_custom_call.1} parent=11 // pred_region
          _
        $region16: #{tpu_custom_call.1} parent=11 // pred_fallthru
          _
        // Predicated region
        $region17: #{tpu_custom_call.1} parent=11 // pred_check
          %p303 = pneg %p131
        $region18: #{tpu_custom_call.1} parent=11 // pred_check_branch
          %305 = sbr.rel (%p303) target = $region20
        $region19: #{tpu_custom_call.1} parent=11 // pred_region
          %s307 = ssub.s32 16, 16
          %308 = vsyncadd [#allocation8], %s307
          %s310 = sshll.u32 [#allocation7], 4
          %s311 = int_to_ptr.vmem [resolvable:$true] %s310
          %313 = dma.hbm_to_vmem [thread:$0]  %s3, 16, %s311, [#allocation8]
        $region20: #{tpu_custom_call.1} parent=11 // pred_fallthru
          _
        // Predicated region
        $region21: #{tpu_custom_call.1} parent=11 // pred_check
          %p314 = pneg %p152
        $region22: #{tpu_custom_call.1} parent=11 // pred_check_branch
          %316 = sbr.rel (%p314) target = $region24
        $region23: #{tpu_custom_call.1} parent=11 // pred_region
          _
        $region24: #{tpu_custom_call.1} parent=11 // pred_fallthru
          _
        // Predicated region
        $region25: #{tpu_custom_call.1} parent=11 // pred_check
          %p317 = pneg %p173
        $region26: #{tpu_custom_call.1} parent=11 // pred_check_branch
          %319 = sbr.rel (%p317) target = $region28
        $region27: #{tpu_custom_call.1} parent=11 // pred_region
          %s321 = ssub.s32 16, 16
          %322 = vsyncadd [#allocation8], %s321
          %s324 = sshll.u32 [#allocation9], 4
          %s325 = int_to_ptr.vmem [resolvable:$true] %s324
          %327 = dma.hbm_to_vmem [thread:$0]  %s5, 16, %s325, [#allocation8]
        $region28: #{tpu_custom_call.1} parent=11 // pred_fallthru
          _
        // Predicated region
        $region29: #{tpu_custom_call.1} parent=11 // pred_check
          %p328 = pneg %p194
        $region30: #{tpu_custom_call.1} parent=11 // pred_check_branch
          %330 = sbr.rel (%p328) target = $region32
        $region31: #{tpu_custom_call.1} parent=11 // pred_region
          _
        $region32: #{tpu_custom_call.1} parent=11 // pred_fallthru
          _
        // Predicated region
        $region33: #{tpu_custom_call.1} parent=11 // pred_check
          %p331 = pneg %p215
        $region34: #{tpu_custom_call.1} parent=11 // pred_check_branch
          %333 = sbr.rel (%p331) target = $region36
        $region35: #{tpu_custom_call.1} parent=11 // pred_region
          _
        $region36: #{tpu_custom_call.1} parent=11 // pred_fallthru
          _
        // Predicated region
        $region37: #{tpu_custom_call.1} parent=11 // pred_check
          %p334 = pneg %p236
        $region38: #{tpu_custom_call.1} parent=11 // pred_check_branch
          %336 = sbr.rel (%p334) target = $region40
        $region39: #{tpu_custom_call.1} parent=11 // pred_region
          _
        $region40: #{tpu_custom_call.1} parent=11 // pred_fallthru
          _
        // Predicated region
        $region41: #{tpu_custom_call.1} parent=11 // pred_check
          %p337 = pneg %p257
        $region42: #{tpu_custom_call.1} parent=11 // pred_check_branch
          %339 = sbr.rel (%p337) target = $region44
        $region43: #{tpu_custom_call.1} parent=11 // pred_region
          _
        $region44: #{tpu_custom_call.1} parent=11 // pred_fallthru
          _
      $region12: #{tpu_custom_call.1} parent=5 // pred_fallthru
        _
      %p340 = scmp.lt.s32.totalorder %s23, 2
      // Predicated region
      $region45: #{tpu_custom_call.1} parent=5 // pred_check
        %p341 = pneg %p340
      $region46: #{tpu_custom_call.1} parent=5 // pred_check_branch
        %343 = sbr.rel (%p341) target = $region48
      $region47: #{tpu_custom_call.1} parent=5 // pred_region
        // Predicated region
        $region49: #{tpu_custom_call.1} parent=47 // pred_check
          %p344 = pneg %p57
        $region50: #{tpu_custom_call.1} parent=47 // pred_check_branch
          %346 = sbr.rel (%p344) target = $region52
        $region51: #{tpu_custom_call.1} parent=47 // pred_region
          %s347 = sand.u32 %s47, 1
          %s348 = scalar_lea.sflag [#allocation5], %s347
          %s349 = sand.u32 %s47, 1
          %s350 = smul.addr %s349, 4
          %s351 = scalar_lea.vmem [#allocation4], %s350
          %s353 = ssub.s32 64, 64
          %354 = vsyncadd %s348, %s353
          %s355 = sadd.s32 %s31, %s30
          %s356 = smul.addr %s355, 64
          %s357 = scalar_lea.hbm %s0, %s356
          %s359 = sshll.u32 %s351, 4
          %s360 = int_to_ptr.vmem [resolvable:$true] %s359
          %362 = dma.hbm_to_vmem [thread:$0]  %s357, 64, %s360, %s348
        $region52: #{tpu_custom_call.1} parent=47 // pred_fallthru
          _
        // Predicated region
        $region53: #{tpu_custom_call.1} parent=47 // pred_check
          %p363 = pneg %p83
        $region54: #{tpu_custom_call.1} parent=47 // pred_check_branch
          %365 = sbr.rel (%p363) target = $region56
        $region55: #{tpu_custom_call.1} parent=47 // pred_region
          %p366 = scmp.lt.s32.totalorder %s30, 1
          %s367 = scalar_select %p366, %s30, 1
          %s368 = smul.addr %s367, 2
          %s369 = smul.addr %s368, 4
          %s370 = scalar_lea.vmem %s1, %s369
        $region56: #{tpu_custom_call.1} parent=47 // pred_fallthru
          _
      $region48: #{tpu_custom_call.1} parent=5 // pred_fallthru
        _
      %p371 = scmp.le.s32.totalorder 1, %s23
      %p372 = scmp.lt.s32.totalorder %s23, 3
      %p373 = pnand %p371, %p372
      %p374 = pneg %p373
      // Predicated region
      $region57: #{tpu_custom_call.1} parent=5 // pred_check
        _
      $region58: #{tpu_custom_call.1} parent=5 // pred_check_branch
        %376 = sbr.rel (%p373) target = $region60
      $region59: #{tpu_custom_call.1} parent=5 // pred_region
        %s377 = ssub.s32 %s23, 1
        %s378 = sand.u32 %s50, 1
        %s379 = scalar_lea.sflag [#allocation5], %s378
        %s380 = sand.u32 %s50, 1
        %s381 = smul.addr %s380, 4
        %s382 = scalar_lea.vmem [#allocation4], %s381
        // Predicated region
        $region61: #{tpu_custom_call.1} parent=59 // pred_check
          %p383 = pneg %p63
        $region62: #{tpu_custom_call.1} parent=59 // pred_check_branch
          %385 = sbr.rel (%p383) target = $region64
        $region63: #{tpu_custom_call.1} parent=59 // pred_region
          %386 = dma.done %s379, 64
        $region64: #{tpu_custom_call.1} parent=59 // pred_fallthru
          _
        // Predicated region
        $region65: #{tpu_custom_call.1} parent=59 // pred_check
          %p387 = pneg %p131
        $region66: #{tpu_custom_call.1} parent=59 // pred_check_branch
          %389 = sbr.rel (%p387) target = $region68
        $region67: #{tpu_custom_call.1} parent=59 // pred_region
          %390 = dma.done [#allocation8], 16
        $region68: #{tpu_custom_call.1} parent=59 // pred_fallthru
          _
        // Predicated region
        $region69: #{tpu_custom_call.1} parent=59 // pred_check
          %p391 = pneg %p173
        $region70: #{tpu_custom_call.1} parent=59 // pred_check_branch
          %393 = sbr.rel (%p391) target = $region72
        $region71: #{tpu_custom_call.1} parent=59 // pred_region
          %394 = dma.done [#allocation8], 16
        $region72: #{tpu_custom_call.1} parent=59 // pred_fallthru
          _
        %s395 = sand.u32 %s50, 1
        %s396 = scalar_lea.sflag [#allocation5], %s395
        %s397 = sand.u32 %s50, 1
        %s398 = smul.addr %s397, 4
        %s399 = scalar_lea.vmem [#allocation4], %s398
        %p400 = pneg %p63
        %p401 = pneg %p60
        %p402 = scmp.lt.s32.totalorder %s32, 1
        %s403 = scalar_select %p402, %s32, 1
        %s404 = smul.addr %s403, 2
        %s405 = smul.addr %s404, 4
        %s406 = scalar_lea.vmem %s1, %s405
        %p407 = pneg %p89
        %p408 = pneg %p86
        %p409 = pneg %p110
        %p410 = pneg %p107
        %p411 = pneg %p131
        %p412 = pneg %p128
        %p413 = pneg %p152
        %p414 = pneg %p149
        %p415 = pneg %p173
        %p416 = pneg %p170
        %p417 = pneg %p194
        %p418 = pneg %p191
        %p419 = pneg %p215
        %p420 = pneg %p212
        %p421 = pneg %p236
        %p422 = pneg %p233
        %p423 = pneg %p257
        %p424 = pneg %p254
        %p425 = pneg %p285
        %p426 = pneg %p282
        %s427 = sand.u32 %s272, 1
        %s428 = scalar_lea.sflag [#allocation6], %s427
        %s429 = sand.u32 %s272, 1
        %s430 = smul.addr %s429, 8
        %s431 = scalar_lea.vmem [#allocation10], %s430
        %p432 = scmp.lt.s32.totalorder %s32, 1
        %s433 = scalar_select %p432, %s32, 1
        %s434 = smul.addr %s433, 2
        %s435 = smul.addr %s434, 4
        %s436 = scalar_lea.vmem %s1, %s435
        %p438 = scmp.eq.s32.totalorder %s33, 0
        // Predicated region
        $region73: #{tpu_custom_call.1} parent=59 // pred_check
          %p439 = pneg %p438
        $region74: #{tpu_custom_call.1} parent=59 // pred_check_branch
          %441 = sbr.rel (%p439) target = $region76
        $region75: #{tpu_custom_call.1} parent=59 // pred_region
          %v442 = vld [vmem:[%s436] sm:$0xf]
          %v443 = vld [vmem:[%s436 + $0x4] sm:$0x1]
          %v444 = vld [vmem:[%s4] sm:$0xf]
          %v445 = vld [vmem:[%s4 + $0x4] sm:$0xf]
          %v446 = vld [vmem:[#allocation9] sm:$0x1]
          %v448 = vlaneseq
          %v449 = vshrl.u32 %v448, 7
          %v450 = vsub.s32 0, %v449
          %v451 = vrot.slane %v446, %v450
          %v455 = vunpack.c.l.b16 %v442
          %v456 = vunpack.c.l.b16 %v443
          %v457 = vpack.c.b16 %v456, %v455
          %v460 = vunpack.c.l.b16 %v444
          %v461 = vunpack.c.l.b16 %v445
          %v462 = vpack.c.b16 %v461, %v460
          %vm464 = vcmask 130048
          %v466 = vsel %vm464, %v457, 0
          %468 = vmatprep.subr.bf16.mxu0 0
          %469 = vmatpush1.bf16.msra.mxu0 %v462
          %470 = vmatprep.subr.bf16.mxu0 0
          %471 = vmatpush1.bf16.msra.mxu0 0
          %472 = vmatprep.subr.bf16.mxu0 0
          %473 = vmatpush1.bf16.msra.mxu0 0
          %474 = vmatprep.subr.bf16.mxu0 0
          %475 = vmatpush1.bf16.msra.mxu0 0
          %476 = vmatprep.subr.bf16.mxu0 0
          %477 = vmatpush1.bf16.msra.mxu0 0
          %478 = vmatprep.subr.bf16.mxu0 0
          %479 = vmatpush1.bf16.msra.mxu0 0
          %480 = vmatprep.subr.bf16.mxu0 0
          %481 = vmatpush1.bf16.msra.mxu0 0
          %482 = vmatprep.subr.bf16.mxu0 0
          %483 = vmatpush1.bf16.msra.mxu0 0
          %484 = vmatprep.subr.bf16.mxu0 0
          %485 = vmatpush1.bf16.msra.mxu0 0
          %486 = vmatprep.subr.bf16.mxu0 0
          %487 = vmatpush1.bf16.msra.mxu0 0
          %488 = vmatprep.subr.bf16.mxu0 0
          %489 = vmatpush1.bf16.msra.mxu0 0
          %490 = vmatprep.subr.bf16.mxu0 0
          %491 = vmatpush1.bf16.msra.mxu0 0
          %492 = vmatprep.subr.bf16.mxu0 0
          %493 = vmatpush1.bf16.msra.mxu0 0
          %494 = vmatprep.subr.bf16.mxu0 0
          %495 = vmatpush1.bf16.msra.mxu0 0
          %496 = vmatprep.subr.bf16.mxu0 0
          %497 = vmatpush1.bf16.msra.mxu0 0
          %498 = vmatprep.subr.bf16.mxu0 0
          %499 = vmatpush1.bf16.msra.mxu0 0
          %500 = vmatprep.mubr.bf16.mxu0 0
          %501 = vmatmul.mubr.bf16.gmra.mrb[0].mxu0 %v466
          %v502 = vpop.f32.mrb[0].mxu0
          %v503 = vadd.f32 %v451, %v502
          %v504 = vpop.f32.mrb[0].mxu0
          %v505 = vpop.f32.mrb[0].mxu0
          %v506 = vadd.f32 %v451, %v505
          %v507 = vpop.f32.mrb[0].mxu0
          %508 = vdwg.mxu0
          %v509 = vld [vmem:[%s6] sm:$0xf]
          %v510 = vld [vmem:[%s6 + $0x4] sm:$0xf]
          %v511 = vld [vmem:[%s7] sm:$0x1]
          %v513 = vlaneseq
          %v514 = vshrl.u32 %v513, 7
          %v515 = vsub.s32 0, %v514
          %v516 = vrot.slane %v511, %v515
          %v520 = vunpack.c.l.b16 %v509
          %v521 = vunpack.c.l.b16 %v510
          %v522 = vpack.c.b16 %v521, %v520
          %524 = vmatprep.subr.bf16.mxu0 0
          %525 = vmatpush1.bf16.msra.mxu0 %v522
          %526 = vmatprep.subr.bf16.mxu0 0
          %527 = vmatpush1.bf16.msra.mxu0 0
          %528 = vmatprep.subr.bf16.mxu0 0
          %529 = vmatpush1.bf16.msra.mxu0 0
          %530 = vmatprep.subr.bf16.mxu0 0
          %531 = vmatpush1.bf16.msra.mxu0 0
          %532 = vmatprep.subr.bf16.mxu0 0
          %533 = vmatpush1.bf16.msra.mxu0 0
          %534 = vmatprep.subr.bf16.mxu0 0
          %535 = vmatpush1.bf16.msra.mxu0 0
          %536 = vmatprep.subr.bf16.mxu0 0
          %537 = vmatpush1.bf16.msra.mxu0 0
          %538 = vmatprep.subr.bf16.mxu0 0
          %539 = vmatpush1.bf16.msra.mxu0 0
          %540 = vmatprep.subr.bf16.mxu0 0
          %541 = vmatpush1.bf16.msra.mxu0 0
          %542 = vmatprep.subr.bf16.mxu0 0
          %543 = vmatpush1.bf16.msra.mxu0 0
          %544 = vmatprep.subr.bf16.mxu0 0
          %545 = vmatpush1.bf16.msra.mxu0 0
          %546 = vmatprep.subr.bf16.mxu0 0
          %547 = vmatpush1.bf16.msra.mxu0 0
          %548 = vmatprep.subr.bf16.mxu0 0
          %549 = vmatpush1.bf16.msra.mxu0 0
          %550 = vmatprep.subr.bf16.mxu0 0
          %551 = vmatpush1.bf16.msra.mxu0 0
          %552 = vmatprep.subr.bf16.mxu0 0
          %553 = vmatpush1.bf16.msra.mxu0 0
          %554 = vmatprep.subr.bf16.mxu0 0
          %555 = vmatpush1.bf16.msra.mxu0 0
          %556 = vmatprep.mubr.bf16.mxu0 0
          %557 = vmatmul.mubr.bf16.gmra.mrb[0].mxu0 %v466
          %v558 = vpop.f32.mrb[0].mxu0
          %v559 = vadd.f32 %v516, %v558
          %v560 = vpop.f32.mrb[0].mxu0
          %v561 = vpop.f32.mrb[0].mxu0
          %v562 = vadd.f32 %v516, %v561
          %v563 = vpop.f32.mrb[0].mxu0
          %564 = vdwg.mxu0
          %v565 = vpack.c.bf16 %v506, %v503
          %v567 = vunpack.c.l.b16 %v565
          %v568 = vunpack.c.h.b16 %v565
          %v569 = vpack.c.b16 %v567, %v567
          %v570 = vpack.c.b16 %v568, %v568
          %vm573 = vcmask 257024
          %574 = vst.msk [vmem:[#allocation2] sm:$0xf] %vm573, %v569
          %vm575 = vcmask 253952
          %576 = vst.msk [vmem:[#allocation2 + $0x4] sm:$0x1] %vm575, %v570
          %v577 = vpack.c.bf16 %v562, %v559
          %v579 = vunpack.c.l.b16 %v577
          %v580 = vunpack.c.h.b16 %v577
          %v581 = vpack.c.b16 %v579, %v579
          %v582 = vpack.c.b16 %v580, %v580
          %585 = vst.msk [vmem:[#allocation3] sm:$0xf] %vm573, %v581
          %586 = vst.msk [vmem:[#allocation3 + $0x4] sm:$0x1] %vm575, %v582
        $region76: #{tpu_custom_call.1} parent=59 // pred_fallthru
          _
        %v587 = vld [vmem:[%s382] sm:$0xf]
        %v588 = vld [vmem:[%s2] sm:$0xf]
        %v589 = vld [vmem:[%s2 + $0x4] sm:$0xf]
        %v590 = vld [vmem:[%s2 + $0x8] sm:$0xf]
        %v591 = vld [vmem:[%s2 + $0xc] sm:$0xf]
        %v592 = vld [vmem:[#allocation7] sm:$0x1]
        %v594 = vlaneseq
        %v595 = vshrl.u32 %v594, 7
        %v596 = vsub.s32 0, %v595
        %v597 = vrot.slane %v592, %v596
        %v603 = vunpack.c.l.b16 %v588
        %v604 = vunpack.c.l.b16 %v589
        %v605 = vunpack.c.l.b16 %v590
        %v606 = vunpack.c.l.b16 %v591
        %v607 = vpack.c.b16 %v604, %v603
        %v608 = vpack.c.b16 %v606, %v605
        %vm611 = vcmask 261120
        %v613 = vsel %vm611, %v587, 0
        %615 = vmatprep.subr.bf16.mxu0 0
        %616 = vmatpush1.bf16.msra.mxu0 %v607
        %617 = vmatprep.subr.bf16.mxu0 0
        %618 = vmatpush1.bf16.msra.mxu0 %v608
        %619 = vmatprep.subr.bf16.mxu0 0
        %620 = vmatpush1.bf16.msra.mxu0 0
        %621 = vmatprep.subr.bf16.mxu0 0
        %622 = vmatpush1.bf16.msra.mxu0 0
        %623 = vmatprep.subr.bf16.mxu0 0
        %624 = vmatpush1.bf16.msra.mxu0 0
        %625 = vmatprep.subr.bf16.mxu0 0
        %626 = vmatpush1.bf16.msra.mxu0 0
        %627 = vmatprep.subr.bf16.mxu0 0
        %628 = vmatpush1.bf16.msra.mxu0 0
        %629 = vmatprep.subr.bf16.mxu0 0
        %630 = vmatpush1.bf16.msra.mxu0 0
        %631 = vmatprep.subr.bf16.mxu0 0
        %632 = vmatpush1.bf16.msra.mxu0 0
        %633 = vmatprep.subr.bf16.mxu0 0
        %634 = vmatpush1.bf16.msra.mxu0 0
        %635 = vmatprep.subr.bf16.mxu0 0
        %636 = vmatpush1.bf16.msra.mxu0 0
        %637 = vmatprep.subr.bf16.mxu0 0
        %638 = vmatpush1.bf16.msra.mxu0 0
        %639 = vmatprep.subr.bf16.mxu0 0
        %640 = vmatpush1.bf16.msra.mxu0 0
        %641 = vmatprep.subr.bf16.mxu0 0
        %642 = vmatpush1.bf16.msra.mxu0 0
        %643 = vmatprep.subr.bf16.mxu0 0
        %644 = vmatpush1.bf16.msra.mxu0 0
        %645 = vmatprep.subr.bf16.mxu0 0
        %646 = vmatpush1.bf16.msra.mxu0 0
        %647 = vmatprep.mubr.bf16.mxu0 0
        %648 = vmatmul.mubr.bf16.gmra.mrb[0].mxu0 %v613
        %v649 = vpop.f32.mrb[0].mxu0
        %v650 = vadd.f32 %v597, %v649
        %v651 = vpop.f32.mrb[0].mxu0
        %v652 = vpop.f32.mrb[0].mxu0
        %v653 = vpop.f32.mrb[0].mxu0
        %654 = vdwg.mxu0
        %v655 = vpack.c.bf16 %v650, %v650
        %v656 = vld [vmem:[#allocation2] sm:$0xf]
        %v657 = vld [vmem:[#allocation2 + $0x4] sm:$0x1]
        %v658 = vld [vmem:[#allocation3] sm:$0xf]
        %v659 = vld [vmem:[#allocation3 + $0x4] sm:$0x1]
        %v662 = vunpack.c.l.b16 %v656
        %v663 = vunpack.c.l.b16 %v657
        %v664 = vpack.c.b16 %v663, %v662
        %vm665 = vcmask 130048
        %v667 = vsel %vm665, %v655, 0
        %v670 = vsel %vm665, %v664, 0
        %672 = vmatprep.subr.bf16.mxu0 0
        %673 = vmatpush1.bf16.xpose.msra.mxu0 %v670
        %674 = vmatprep.subr.bf16.mxu0 0
        %675 = vmatpush1.bf16.xpose.msra.mxu0 0
        %676 = vmatprep.subr.bf16.mxu0 0
        %677 = vmatpush1.bf16.xpose.msra.mxu0 0
        %678 = vmatprep.subr.bf16.mxu0 0
        %679 = vmatpush1.bf16.xpose.msra.mxu0 0
        %680 = vmatprep.subr.bf16.mxu0 0
        %681 = vmatpush1.bf16.xpose.msra.mxu0 0
        %682 = vmatprep.subr.bf16.mxu0 0
        %683 = vmatpush1.bf16.xpose.msra.mxu0 0
        %684 = vmatprep.subr.bf16.mxu0 0
        %685 = vmatpush1.bf16.xpose.msra.mxu0 0
        %686 = vmatprep.subr.bf16.mxu0 0
        %687 = vmatpush1.bf16.xpose.msra.mxu0 0
        %688 = vmatprep.subr.bf16.mxu0 0
        %689 = vmatpush1.bf16.xpose.msra.mxu0 0
        %690 = vmatprep.subr.bf16.mxu0 0
        %691 = vmatpush1.bf16.xpose.msra.mxu0 0
        %692 = vmatprep.subr.bf16.mxu0 0
        %693 = vmatpush1.bf16.xpose.msra.mxu0 0
        %694 = vmatprep.subr.bf16.mxu0 0
        %695 = vmatpush1.bf16.xpose.msra.mxu0 0
        %696 = vmatprep.subr.bf16.mxu0 0
        %697 = vmatpush1.bf16.xpose.msra.mxu0 0
        %698 = vmatprep.subr.bf16.mxu0 0
        %699 = vmatpush1.bf16.xpose.msra.mxu0 0
        %700 = vmatprep.subr.bf16.mxu0 0
        %701 = vmatpush1.bf16.xpose.msra.mxu0 0
        %702 = vmatprep.subr.bf16.mxu0 0
        %703 = vmatpush1.bf16.xpose.msra.mxu0 0
        %704 = vmatprep.mubr.bf16.mxu0 0
        %705 = vmatmul.mubr.bf16.gmra.mrb[0].mxu0 %v667
        %v706 = vpop.f32.mrb[0].mxu0
        %v707 = vadd.f32 0.0, %v706
        %v708 = vpop.f32.mrb[0].mxu0
        %v709 = vpop.f32.mrb[0].mxu0
        %v710 = vpop.f32.mrb[0].mxu0
        %711 = vdwg.mxu0
        %vm712 = vcmask 80896
        %v713 = vsel %vm712, %v707, -inf
        %714 = vmax.xlane.f32.xlu0 %v713
        %v715 = vpop.xlane.xlu0 %714
        %v716 = vsub.f32 %v707, %v715
        %v717 = vmul.f32 %v716, 1.442695
        %v718 = vpow.pop %v717
        %v719 = vsel %vm712, %v718, 0.0
        %720 = vadd.xlane.f32.xlu0 %v719
        %v721 = vpop.xlane.xlu0 %720
        %v722 = vrcp.pop %v721
        %v723 = vmul.f32 %v718, %v722
        %v724 = vpack.c.bf16 %v723, %v723
        %v727 = vunpack.c.l.b16 %v658
        %v728 = vunpack.c.l.b16 %v659
        %v729 = vpack.c.b16 %v728, %v727
        %v731 = vsel %vm712, %v724, 0
        %vm733 = vcmask 1044480
        %v735 = vsel %vm733, %v729, 0
        %737 = vmatprep.subr.bf16.mxu0 0
        %738 = vmatpush1.bf16.msra.mxu0 %v735
        %739 = vmatprep.subr.bf16.mxu0 0
        %740 = vmatpush1.bf16.msra.mxu0 0
        %741 = vmatprep.subr.bf16.mxu0 0
        %742 = vmatpush1.bf16.msra.mxu0 0
        %743 = vmatprep.subr.bf16.mxu0 0
        %744 = vmatpush1.bf16.msra.mxu0 0
        %745 = vmatprep.subr.bf16.mxu0 0
        %746 = vmatpush1.bf16.msra.mxu0 0
        %747 = vmatprep.subr.bf16.mxu0 0
        %748 = vmatpush1.bf16.msra.mxu0 0
        %749 = vmatprep.subr.bf16.mxu0 0
        %750 = vmatpush1.bf16.msra.mxu0 0
        %751 = vmatprep.subr.bf16.mxu0 0
        %752 = vmatpush1.bf16.msra.mxu0 0
        %753 = vmatprep.subr.bf16.mxu0 0
        %754 = vmatpush1.bf16.msra.mxu0 0
        %755 = vmatprep.subr.bf16.mxu0 0
        %756 = vmatpush1.bf16.msra.mxu0 0
        %757 = vmatprep.subr.bf16.mxu0 0
        %758 = vmatpush1.bf16.msra.mxu0 0
        %759 = vmatprep.subr.bf16.mxu0 0
        %760 = vmatpush1.bf16.msra.mxu0 0
        %761 = vmatprep.subr.bf16.mxu0 0
        %762 = vmatpush1.bf16.msra.mxu0 0
        %763 = vmatprep.subr.bf16.mxu0 0
        %764 = vmatpush1.bf16.msra.mxu0 0
        %765 = vmatprep.subr.bf16.mxu0 0
        %766 = vmatpush1.bf16.msra.mxu0 0
        %767 = vmatprep.subr.bf16.mxu0 0
        %768 = vmatpush1.bf16.msra.mxu0 0
        %769 = vmatprep.mubr.bf16.mxu0 0
        %770 = vmatmul.mubr.bf16.gmra.mrb[0].mxu0 %v731
        %v771 = vpop.f32.mrb[0].mxu0
        %v772 = vadd.f32 0.0, %v771
        %v773 = vpop.f32.mrb[0].mxu0
        %v774 = vpop.f32.mrb[0].mxu0
        %v775 = vpop.f32.mrb[0].mxu0
        %776 = vdwg.mxu0
        %v777 = vpack.c.bf16 %v772, %v772
        %v778 = vld [vmem:[%s8] sm:$0xf]
        %v779 = vld [vmem:[%s8 + $0x4] sm:$0xf]
        %781 = vrot.lane.b32.xlu0 %v655, 112
        %v782 = vpop.permute.xlu0 %781
        %783 = vrot.lane.b32.xlu0 %v664, 112
        %v784 = vpop.permute.xlu0 %783
        %v786 = vsel %vm665, %v782, 0
        %v789 = vsel %vm665, %v784, 0
        %791 = vmatprep.subr.bf16.mxu0 0
        %792 = vmatpush1.bf16.xpose.msra.mxu0 %v789
        %793 = vmatprep.subr.bf16.mxu0 0
        %794 = vmatpush1.bf16.xpose.msra.mxu0 0
        %795 = vmatprep.subr.bf16.mxu0 0
        %796 = vmatpush1.bf16.xpose.msra.mxu0 0
        %797 = vmatprep.subr.bf16.mxu0 0
        %798 = vmatpush1.bf16.xpose.msra.mxu0 0
        %799 = vmatprep.subr.bf16.mxu0 0
        %800 = vmatpush1.bf16.xpose.msra.mxu0 0
        %801 = vmatprep.subr.bf16.mxu0 0
        %802 = vmatpush1.bf16.xpose.msra.mxu0 0
        %803 = vmatprep.subr.bf16.mxu0 0
        %804 = vmatpush1.bf16.xpose.msra.mxu0 0
        %805 = vmatprep.subr.bf16.mxu0 0
        %806 = vmatpush1.bf16.xpose.msra.mxu0 0
        %807 = vmatprep.subr.bf16.mxu0 0
        %808 = vmatpush1.bf16.xpose.msra.mxu0 0
        %809 = vmatprep.subr.bf16.mxu0 0
        %810 = vmatpush1.bf16.xpose.msra.mxu0 0
        %811 = vmatprep.subr.bf16.mxu0 0
        %812 = vmatpush1.bf16.xpose.msra.mxu0 0
        %813 = vmatprep.subr.bf16.mxu0 0
        %814 = vmatpush1.bf16.xpose.msra.mxu0 0
        %815 = vmatprep.subr.bf16.mxu0 0
        %816 = vmatpush1.bf16.xpose.msra.mxu0 0
        %817 = vmatprep.subr.bf16.mxu0 0
        %818 = vmatpush1.bf16.xpose.msra.mxu0 0
        %819 = vmatprep.subr.bf16.mxu0 0
        %820 = vmatpush1.bf16.xpose.msra.mxu0 0
        %821 = vmatprep.subr.bf16.mxu0 0
        %822 = vmatpush1.bf16.xpose.msra.mxu0 0
        %823 = vmatprep.mubr.bf16.mxu0 0
        %824 = vmatmul.mubr.bf16.gmra.mrb[0].mxu0 %v786
        %v825 = vpop.f32.mrb[0].mxu0
        %v826 = vadd.f32 0.0, %v825
        %v827 = vpop.f32.mrb[0].mxu0
        %v828 = vpop.f32.mrb[0].mxu0
        %v829 = vpop.f32.mrb[0].mxu0
        %830 = vdwg.mxu0
        %v831 = vsel %vm712, %v826, -inf
        %832 = vmax.xlane.f32.xlu0 %v831
        %v833 = vpop.xlane.xlu0 %832
        %v834 = vsub.f32 %v826, %v833
        %v835 = vmul.f32 %v834, 1.442695
        %v836 = vpow.pop %v835
        %v837 = vsel %vm712, %v836, 0.0
        %838 = vadd.xlane.f32.xlu0 %v837
        %v839 = vpop.xlane.xlu0 %838
        %v840 = vrcp.pop %v839
        %v841 = vmul.f32 %v836, %v840
        %v842 = vpack.c.bf16 %v841, %v841
        %843 = vrot.lane.b32.xlu0 %v729, 112
        %v844 = vpop.permute.xlu0 %843
        %v846 = vsel %vm712, %v842, 0
        %v849 = vsel %vm733, %v844, 0
        %851 = vmatprep.subr.bf16.mxu0 0
        %852 = vmatpush1.bf16.msra.mxu0 %v849
        %853 = vmatprep.subr.bf16.mxu0 0
        %854 = vmatpush1.bf16.msra.mxu0 0
        %855 = vmatprep.subr.bf16.mxu0 0
        %856 = vmatpush1.bf16.msra.mxu0 0
        %857 = vmatprep.subr.bf16.mxu0 0
        %858 = vmatpush1.bf16.msra.mxu0 0
        %859 = vmatprep.subr.bf16.mxu0 0
        %860 = vmatpush1.bf16.msra.mxu0 0
        %861 = vmatprep.subr.bf16.mxu0 0
        %862 = vmatpush1.bf16.msra.mxu0 0
        %863 = vmatprep.subr.bf16.mxu0 0
        %864 = vmatpush1.bf16.msra.mxu0 0
        %865 = vmatprep.subr.bf16.mxu0 0
        %866 = vmatpush1.bf16.msra.mxu0 0
        %867 = vmatprep.subr.bf16.mxu0 0
        %868 = vmatpush1.bf16.msra.mxu0 0
        %869 = vmatprep.subr.bf16.mxu0 0
        %870 = vmatpush1.bf16.msra.mxu0 0
        %871 = vmatprep.subr.bf16.mxu0 0
        %872 = vmatpush1.bf16.msra.mxu0 0
        %873 = vmatprep.subr.bf16.mxu0 0
        %874 = vmatpush1.bf16.msra.mxu0 0
        %875 = vmatprep.subr.bf16.mxu0 0
        %876 = vmatpush1.bf16.msra.mxu0 0
        %877 = vmatprep.subr.bf16.mxu0 0
        %878 = vmatpush1.bf16.msra.mxu0 0
        %879 = vmatprep.subr.bf16.mxu0 0
        %880 = vmatpush1.bf16.msra.mxu0 0
        %881 = vmatprep.subr.bf16.mxu0 0
        %882 = vmatpush1.bf16.msra.mxu0 0
        %883 = vmatprep.mubr.bf16.mxu0 0
        %884 = vmatmul.mubr.bf16.gmra.mrb[0].mxu0 %v846
        %v885 = vpop.f32.mrb[0].mxu0
        %v886 = vadd.f32 0.0, %v885
        %v887 = vpop.f32.mrb[0].mxu0
        %v888 = vpop.f32.mrb[0].mxu0
        %v889 = vpop.f32.mrb[0].mxu0
        %890 = vdwg.mxu0
        %v891 = vpack.c.bf16 %v886, %v886
        %v892 = vld [vmem:[%s8 + $0x8] sm:$0xf]
        %v893 = vld [vmem:[%s8 + $0xc] sm:$0xf]
        %v896 = vunpack.c.l.b16 %v892
        %v897 = vunpack.c.l.b16 %v893
        %v898 = vpack.c.b16 %v897, %v896
        %v901 = vsel %vm665, %v891, 0
        %903 = vmatprep.subr.bf16.mxu0 0
        %904 = vmatpush1.bf16.msra.mxu0 %v898
        %905 = vmatprep.subr.bf16.mxu0 0
        %906 = vmatpush1.bf16.msra.mxu0 0
        %907 = vmatprep.subr.bf16.mxu0 0
        %908 = vmatpush1.bf16.msra.mxu0 0
        %909 = vmatprep.subr.bf16.mxu0 0
        %910 = vmatpush1.bf16.msra.mxu0 0
        %911 = vmatprep.subr.bf16.mxu0 0
        %912 = vmatpush1.bf16.msra.mxu0 0
        %913 = vmatprep.subr.bf16.mxu0 0
        %914 = vmatpush1.bf16.msra.mxu0 0
        %915 = vmatprep.subr.bf16.mxu0 0
        %916 = vmatpush1.bf16.msra.mxu0 0
        %917 = vmatprep.subr.bf16.mxu0 0
        %918 = vmatpush1.bf16.msra.mxu0 0
        %919 = vmatprep.subr.bf16.mxu0 0
        %920 = vmatpush1.bf16.msra.mxu0 0
        %921 = vmatprep.subr.bf16.mxu0 0
        %922 = vmatpush1.bf16.msra.mxu0 0
        %923 = vmatprep.subr.bf16.mxu0 0
        %924 = vmatpush1.bf16.msra.mxu0 0
        %925 = vmatprep.subr.bf16.mxu0 0
        %926 = vmatpush1.bf16.msra.mxu0 0
        %927 = vmatprep.subr.bf16.mxu0 0
        %928 = vmatpush1.bf16.msra.mxu0 0
        %929 = vmatprep.subr.bf16.mxu0 0
        %930 = vmatpush1.bf16.msra.mxu0 0
        %931 = vmatprep.subr.bf16.mxu0 0
        %932 = vmatpush1.bf16.msra.mxu0 0
        %933 = vmatprep.subr.bf16.mxu0 0
        %934 = vmatpush1.bf16.msra.mxu0 0
        %935 = vmatprep.mubr.bf16.mxu0 0
        %936 = vmatmul.mubr.bf16.gmra.mrb[0].mxu0 %v901
        %v937 = vpop.f32.mrb[0].mxu0
        %v938 = vadd.f32 0.0, %v937
        %v939 = vpop.f32.mrb[0].mxu0
        %v940 = vpop.f32.mrb[0].mxu0
        %v941 = vpop.f32.mrb[0].mxu0
        %942 = vdwg.mxu0
        %v945 = vunpack.c.l.b16 %v778
        %v946 = vunpack.c.l.b16 %v779
        %v947 = vpack.c.b16 %v946, %v945
        %v950 = vsel %vm665, %v777, 0
        %952 = vmatprep.subr.bf16.mxu0 0
        %953 = vmatpush1.bf16.msra.mxu0 %v947
        %954 = vmatprep.subr.bf16.mxu0 0
        %955 = vmatpush1.bf16.msra.mxu0 0
        %956 = vmatprep.subr.bf16.mxu0 0
        %957 = vmatpush1.bf16.msra.mxu0 0
        %958 = vmatprep.subr.bf16.mxu0 0
        %959 = vmatpush1.bf16.msra.mxu0 0
        %960 = vmatprep.subr.bf16.mxu0 0
        %961 = vmatpush1.bf16.msra.mxu0 0
        %962 = vmatprep.subr.bf16.mxu0 0
        %963 = vmatpush1.bf16.msra.mxu0 0
        %964 = vmatprep.subr.bf16.mxu0 0
        %965 = vmatpush1.bf16.msra.mxu0 0
        %966 = vmatprep.subr.bf16.mxu0 0
        %967 = vmatpush1.bf16.msra.mxu0 0
        %968 = vmatprep.subr.bf16.mxu0 0
        %969 = vmatpush1.bf16.msra.mxu0 0
        %970 = vmatprep.subr.bf16.mxu0 0
        %971 = vmatpush1.bf16.msra.mxu0 0
        %972 = vmatprep.subr.bf16.mxu0 0
        %973 = vmatpush1.bf16.msra.mxu0 0
        %974 = vmatprep.subr.bf16.mxu0 0
        %975 = vmatpush1.bf16.msra.mxu0 0
        %976 = vmatprep.subr.bf16.mxu0 0
        %977 = vmatpush1.bf16.msra.mxu0 0
        %978 = vmatprep.subr.bf16.mxu0 0
        %979 = vmatpush1.bf16.msra.mxu0 0
        %980 = vmatprep.subr.bf16.mxu0 0
        %981 = vmatpush1.bf16.msra.mxu0 0
        %982 = vmatprep.subr.bf16.mxu0 0
        %983 = vmatpush1.bf16.msra.mxu0 0
        %984 = vmatprep.mubr.bf16.mxu0 0
        %985 = vmatmul.mubr.bf16.gmra.mrb[0].mxu0 %v950
        %v986 = vpop.f32.mrb[0].mxu0
        %v987 = vadd.f32 %v938, %v986
        %v988 = vpop.f32.mrb[0].mxu0
        %v989 = vpop.f32.mrb[0].mxu0
        %v990 = vpop.f32.mrb[0].mxu0
        %991 = vdwg.mxu0
        %v992 = vld [vmem:[%s9] sm:$0x1]
        %v994 = vlaneseq
        %v995 = vshrl.u32 %v994, 7
        %v996 = vsub.s32 0, %v995
        %v997 = vrot.slane %v992, %v996
        %v999 = vadd.f32 %v987, %v997
        %1000 = vst.msk [vmem:[%s431] sm:$0xff] %vm611, %v999
        %s1001 = sand.u32 %s272, 1
        %s1002 = scalar_lea.sflag [#allocation6], %s1001
        %s1003 = sand.u32 %s272, 1
        %s1004 = smul.addr %s1003, 8
        %s1005 = scalar_lea.vmem [#allocation10], %s1004
        // Predicated region
        $region77: #{tpu_custom_call.1} parent=59 // pred_check
          %p1006 = pneg %p282
        $region78: #{tpu_custom_call.1} parent=59 // pred_check_branch
          %1008 = sbr.rel (%p1006) target = $region80
        $region79: #{tpu_custom_call.1} parent=59 // pred_region
          %s1010 = ssub.s32 128, 128
          %1011 = vsyncadd %s1002, %s1010
          %s1012 = sadd.s32 %s33, %s32
          %s1013 = smul.addr %s1012, 128
          %s1014 = scalar_lea.hbm %s10, %s1013
          %s1016 = sshll.u32 %s1005, 4
          %s1017 = int_to_ptr.vmem [resolvable:$true] %s1016
          %1019 = dma.vmem_to_hbm [thread:$0]  %s1017, 128, %s1014, %s1002
        $region80: #{tpu_custom_call.1} parent=59 // pred_fallthru
          _
      $region60: #{tpu_custom_call.1} parent=5 // pred_fallthru
        _
      %p1020 = scmp.le.s32.totalorder 2, %s23
      // Predicated region
      $region81: #{tpu_custom_call.1} parent=5 // pred_check
        %p1021 = pneg %p1020
      $region82: #{tpu_custom_call.1} parent=5 // pred_check_branch
        %1023 = sbr.rel (%p1021) target = $region84
      $region83: #{tpu_custom_call.1} parent=5 // pred_region
        %s1024 = ssub.s32 %s23, 2
        // Predicated region
        $region85: #{tpu_custom_call.1} parent=83 // pred_check
          %p1025 = pneg %p288
        $region86: #{tpu_custom_call.1} parent=83 // pred_check_branch
          %1027 = sbr.rel (%p1025) target = $region88
        $region87: #{tpu_custom_call.1} parent=83 // pred_region
          %s1028 = sand.u32 %s273, 1
          %s1029 = scalar_lea.sflag [#allocation6], %s1028
          %s1030 = sand.u32 %s273, 1
          %s1031 = smul.addr %s1030, 8
          %s1032 = scalar_lea.vmem [#allocation10], %s1031
          %1033 = dma.done %s1029, 128
        $region88: #{tpu_custom_call.1} parent=83 // pred_fallthru
          _
      $region84: #{tpu_custom_call.1} parent=5 // pred_fallthru
        _
    $region6: #{tpu_custom_call.1} parent=1 // loop_footer
      %s27 = sadd.s32 1, %s23
    $region7: #{tpu_custom_call.1} parent=1 // loop_footer_branch
      %22 = sbr.rel target = $region3
    $region8: #{tpu_custom_call.1} parent=1 // loop_exit
      _
    %1034 = vsyncpa [#allocation5], 1
    %s1035 = scalar_lea.sflag [#allocation5], 1
    %1036 = vsyncpa %s1035, 1
    %1037 = vsyncpa [#allocation8], 1
    %1038 = vsyncpa [#allocation6], 1
    %s1039 = scalar_lea.sflag [#allocation6], 1
    %1040 = vsyncpa %s1039, 1

</llo_original>
